<compile_context>
chip_gen: v7x
topology: tpu7x:2x2x1
jax: 0.10.0
libtpu: 0.0.40
codegen_flags: <defaults>
</compile_context>

<pallas_src>
import functools
import math

import jax
import jax.numpy as jnp
from jax import lax
from jax.experimental import pallas as pl
from jax.experimental.pallas import tpu as pltpu

BN_EPS = 1e-5


# --------------------------------------------------------------------------
# In-kernel helpers
# --------------------------------------------------------------------------
def _conv3x3_bn_prelu(x, w_ref, b_ref, alpha, mask, stack_ref, wp):
    """3x3 'same' conv + folded BN + PReLU on a padded-flat (C, Np) slab.

    x        : (C, Np) f32, zero border / zero lane-pad
    w_ref    : (O, 9*C) bf16, columns ordered (kh*3+kw)*C + c
    b_ref    : (O, 1)   f32 folded bias
    stack_ref: (9*C, Np) f32 VMEM staging scratch for the shifted slabs
    returns  : (O, Np) f32, border/pad lanes zeroed by `mask`
    """
    c, n = x.shape
    xs = x.astype(stack_ref.dtype)
    for kh in range(3):
        for kw in range(3):
            tap = kh * 3 + kw
            # stacked[tap*c + ch, p] = x[ch, p + delta]  (circular; wrap only
            # hits border/pad pixels which are masked out of the output).
            shift = (-((kh - 1) * wp + (kw - 1))) % n
            rolled = xs if shift == 0 else pltpu.roll(xs, shift=shift, axis=1)
            stack_ref[tap * c:(tap + 1) * c, :] = rolled
    # Single MXU matmul over the fused contraction dim K = 9*C.
    y = jnp.dot(w_ref[...], stack_ref[...].astype(jnp.bfloat16),
                preferred_element_type=jnp.float32)
    y = y + b_ref[...]                                   # bias, lane broadcast
    y = jnp.where(y >= 0.0, y, alpha * y)                # PReLU (scalar alpha)
    return y * mask                                      # zero border/pad


def _cam(y, gamma, inv_sqrt_hw):
    """Channel-attention module on a padded-flat (C, Np) slab (f32)."""
    # energy = s * y @ y.T, s = 1/sqrt(H*W); zero border/pad lanes contribute
    # nothing.  Contraction is over the lane dims of both operands, so no big
    # (Np, C) transpose is materialized.
    energy = lax.dot_general(
        y, y, (((1,), (1,)), ((), ())),
        preferred_element_type=jnp.float32) * inv_sqrt_hw           # (C, C)
    energy_new = jnp.max(energy, axis=-1, keepdims=True) - energy
    e = jnp.exp(energy_new - jnp.max(energy_new, axis=-1, keepdims=True))
    attn = e / jnp.sum(e, axis=-1, keepdims=True)                    # (C, C)
    out = jnp.dot(attn, y, preferred_element_type=jnp.float32)       # (C, Np)
    return gamma * out + y                                           # residual


# --------------------------------------------------------------------------
# Fused Pallas kernel: conv1+BN+PReLU -> CAM -> conv2+BN+PReLU (per image)
# --------------------------------------------------------------------------
def _fused_kernel(x_ref, w1_ref, b1_ref, w2_ref, b2_ref, scal_ref, mask_ref,
                  o_ref, stack1_ref, stack2_ref, *, wp, inv_sqrt_hw):
    # x_ref   : (1, C,  Np) f32   padded-flat input (zero border + zero pad)
    # w1_ref  : (M, 9C) bf16, b1_ref: (M, 1) f32
    # w2_ref  : (O, 9M) bf16, b2_ref: (O, 1) f32
    # scal_ref: (3,) f32 SMEM  [prelu1_alpha, prelu2_alpha, cam_gamma]
    # mask_ref: (1, Np) f32   1 on interior pixels, 0 on border + pad lanes
    # o_ref   : (1, O, Np) f32
    mask = mask_ref[...]
    y1 = _conv3x3_bn_prelu(x_ref[0], w1_ref, b1_ref, scal_ref[0], mask,
                           stack1_ref, wp)               # (M, Np), zero border
    y2 = _cam(y1, scal_ref[2], inv_sqrt_hw)              # (M, Np), zero border
    y3 = _conv3x3_bn_prelu(y2, w2_ref, b2_ref, scal_ref[1], mask,
                           stack2_ref, wp)               # (O, Np)
    o_ref[0] = y3


# --------------------------------------------------------------------------
# Host-side parameter folding (BN scale -> weights, BN shift -> bias)
# --------------------------------------------------------------------------
def _fold_bn(w, conv_b, bn_g, bn_b, bn_mean, bn_var):
    s = bn_g / jnp.sqrt(bn_var + BN_EPS)                  # (O,)
    w_f = w * s[:, None, None, None]                      # (O, C, 3, 3)
    b_f = (conv_b - bn_mean) * s + bn_b                   # (O,)
    o, c = w.shape[0], w.shape[1]
    # (O, C, 3, 3) -> (O, 3, 3, C) -> (O, 9C); column = (kh*3+kw)*C + ch,
    # matching the stacked-slab layout built in the kernel.
    w_fused = jnp.transpose(w_f, (0, 2, 3, 1)).reshape(o, 9 * c)
    return w_fused.astype(jnp.bfloat16), b_f.reshape(-1, 1).astype(jnp.float32)


# --------------------------------------------------------------------------
# Full Conv_CAM_Layer forward
# --------------------------------------------------------------------------
def conv_cam_layer_forward(x, params):
    B, C, H, W = x.shape
    Hp, Wp = H + 2, W + 2
    np_raw = Hp * Wp
    Np = ((np_raw + 127) // 128) * 128          # lane-dense (128-multiple)

    # One-time layout prep: zero-pad spatially, flatten per channel, pad lanes.
    x_pf = jnp.pad(x, ((0, 0), (0, 0), (1, 1), (1, 1))).reshape(B, C, np_raw)
    x_pf = jnp.pad(x_pf, ((0, 0), (0, 0), (0, Np - np_raw)))
    mask = jnp.pad(jnp.ones((H, W), jnp.float32), ((1, 1), (1, 1)))
    mask = jnp.pad(mask.reshape(1, np_raw), ((0, 0), (0, Np - np_raw)))

    w1, b1 = _fold_bn(params["w1"], params["b1"], params["bn1_g"],
                      params["bn1_b"], params["bn1_mean"], params["bn1_var"])
    w2, b2 = _fold_bn(params["w2"], params["b2"], params["bn2_g"],
                      params["bn2_b"], params["bn2_mean"], params["bn2_var"])
    mid = w1.shape[0]
    o2 = w2.shape[0]
    scalars = jnp.concatenate([
        params["prelu1_a"].reshape(1), params["prelu2_a"].reshape(1),
        params["cam_gamma"].reshape(1)]).astype(jnp.float32)

    flops = (2 * B * Np * 9 * (C * mid + mid * o2)        # two convs
             + 4 * B * mid * mid * Np)                    # CAM energy + attn@x
    cost = pl.CostEstimate(
        flops=int(flops),
        transcendentals=int(B * mid * mid),
        bytes_accessed=int(4 * B * Np * (C + o2)
                           + 2 * 9 * (C * mid + mid * o2) + 4 * Np))

    kern = functools.partial(_fused_kernel, wp=Wp,
                             inv_sqrt_hw=1.0 / math.sqrt(H * W))
    y = pl.pallas_call(
        kern,
        out_shape=jax.ShapeDtypeStruct((B, o2, Np), jnp.float32),
        grid=(B,),
        in_specs=[
            pl.BlockSpec((1, C, Np), lambda b: (b, 0, 0)),
            pl.BlockSpec((mid, 9 * C), lambda b: (0, 0)),
            pl.BlockSpec((mid, 1), lambda b: (0, 0)),
            pl.BlockSpec((o2, 9 * mid), lambda b: (0, 0)),
            pl.BlockSpec((o2, 1), lambda b: (0, 0)),
            pl.BlockSpec(memory_space=pltpu.MemorySpace.SMEM),
            pl.BlockSpec((1, Np), lambda b: (0, 0)),
        ],
        out_specs=pl.BlockSpec((1, o2, Np), lambda b: (b, 0, 0)),
        scratch_shapes=[
            pltpu.VMEM((9 * C, Np), jnp.float32),     # conv1 tap staging
            pltpu.VMEM((9 * mid, Np), jnp.float32),   # conv2 tap staging
        ],
        compiler_params=pltpu.CompilerParams(
            dimension_semantics=("parallel",),
            vmem_limit_bytes=32 * 1024 * 1024),
        cost_estimate=cost,
    )(x_pf, w1, b1, w2, b2, scalars, mask)

    return y[:, :, :np_raw].reshape(B, o2, Hp, Wp)[:, :, 1:H + 1, 1:W + 1]


# --------------------------------------------------------------------------
# Pure-JAX reference (mirrors the intended bf16 rounding of conv operands)
# --------------------------------------------------------------------------
def _conv_bn_prelu_ref(x, w, conv_b, bn_g, bn_b, bn_mean, bn_var, alpha):
    s = bn_g / jnp.sqrt(bn_var + BN_EPS)
    wf = (w * s[:, None, None, None]).astype(jnp.bfloat16).astype(jnp.float32)
    bf = (conv_b - bn_mean) * s + bn_b
    xb = x.astype(jnp.bfloat16).astype(jnp.float32)
    y = lax.conv_general_dilated(
        xb, wf, (1, 1), ((1, 1), (1, 1)),
        dimension_numbers=("NCHW", "OIHW", "NCHW"),
        precision=lax.Precision.HIGHEST)
    y = y + bf[None, :, None, None]
    return jnp.where(y >= 0, y, alpha * y)


def _cam_ref(x, gamma):
    B, C, H, W = x.shape
    scale = 1.0 / math.sqrt(H * W)                         # matches PyTorch
    xf = x.reshape(B, C, H * W)
    energy = jnp.einsum("bcx,bdx->bcd", xf, xf,
                        precision=lax.Precision.HIGHEST) * scale
    energy_new = jnp.max(energy, -1, keepdims=True) - energy
    attn = jax.nn.softmax(energy_new, axis=-1)
    out = jnp.einsum("bcd,bdx->bcx", attn, xf,
                     precision=lax.Precision.HIGHEST)
    return (gamma * out + xf).reshape(B, C, H, W)


def _reference(x, p):
    y = _conv_bn_prelu_ref(x, p["w1"], p["b1"], p["bn1_g"], p["bn1_b"],
                           p["bn1_mean"], p["bn1_var"], p["prelu1_a"][0])
    y = _cam_ref(y, p["cam_gamma"][0])
    y = _conv_bn_prelu_ref(y, p["w2"], p["b2"], p["bn2_g"], p["bn2_b"],
                           p["bn2_mean"], p["bn2_var"], p["prelu2_a"][0])
    return y


# --------------------------------------------------------------------------
# Deterministic parameter init (shapes from Conv_CAM_Layer.__init__)
# --------------------------------------------------------------------------
def make_params(key, in_ch, out_in, mid=32):
    ks = jax.random.split(key, 8)
    f1 = 1.0 / math.sqrt(in_ch * 9)
    f2 = 1.0 / math.sqrt(mid * 9)
    return {
        "w1": jax.random.uniform(ks[0], (mid, in_ch, 3, 3), jnp.float32, -f1, f1),
        "b1": jax.random.uniform(ks[1], (mid,), jnp.float32, -f1, f1),
        "bn1_g": jnp.ones((mid,), jnp.float32),
        "bn1_b": jnp.zeros((mid,), jnp.float32),
        "bn1_mean": 0.1 * jax.random.normal(ks[2], (mid,), jnp.float32),
        "bn1_var": jnp.abs(jax.random.normal(ks[3], (mid,), jnp.float32)) + 0.5,
        "prelu1_a": jnp.full((1,), 0.25, jnp.float32),
        # PyTorch inits CAM gamma to 0; use a nonzero deterministic value so
        # the attention path actually contributes to the output.
        "cam_gamma": jnp.full((1,), 0.5, jnp.float32),
        "w2": jax.random.uniform(ks[4], (out_in, mid, 3, 3), jnp.float32, -f2, f2),
        "b2": jax.random.uniform(ks[5], (out_in,), jnp.float32, -f2, f2),
        "bn2_g": jnp.ones((out_in,), jnp.float32),
        "bn2_b": jnp.zeros((out_in,), jnp.float32),
        "bn2_mean": 0.1 * jax.random.normal(ks[6], (out_in,), jnp.float32),
        "bn2_var": jnp.abs(jax.random.normal(ks[7], (out_in,), jnp.float32)) + 0.5,
        "prelu2_a": jnp.full((1,), 0.25, jnp.float32),
    }


if __name__ == "__main__":
    key = jax.random.PRNGKey(0)
    k_x, k_p = jax.random.split(key)

    B, in_ch, H, W = 2, 4, 16, 16
    out_in = 4
    x = jax.random.normal(k_x, (B, in_ch, H, W), jnp.float32)
    params = make_params(k_p, in_ch, out_in)

    out = jax.jit(conv_cam_layer_forward)(x, params)
    out = jax.block_until_ready(out)

    ref = _reference(x, params)
    assert out.shape == (B, out_in, H, W)
    err = float(jnp.max(jnp.abs(out - ref)))
    assert jnp.allclose(out, ref, rtol=5e-3, atol=5e-3), err

    print("KERNEL_OK")
</pallas_src>

<mosaic_0001>
module attributes {stable_mosaic.version = 11 : i64} {
  func.func @_fused_kernel(%arg0: i32, %arg1: memref<1x4x384xf32, #tpu.memory_space<vmem>>, %arg2: memref<32x36xbf16, #tpu.memory_space<vmem>>, %arg3: memref<32x1xf32, #tpu.memory_space<vmem>>, %arg4: memref<4x288xbf16, #tpu.memory_space<vmem>>, %arg5: memref<4x1xf32, #tpu.memory_space<vmem>>, %arg6: memref<3xf32, #tpu.memory_space<smem>>, %arg7: memref<1x384xf32, #tpu.memory_space<vmem>>, %arg8: memref<1x4x384xf32, #tpu.memory_space<vmem>>, %arg9: memref<36x384xf32, #tpu.memory_space<vmem>>, %arg10: memref<288x384xf32, #tpu.memory_space<vmem>>) attributes {dimension_semantics = [#tpu.dimension_semantics<parallel>], iteration_bounds = array<i64: 2>, scalar_prefetch = 0 : i64, scratch_operands = 2 : i64, tpu.core_type = #tpu.core_type<tc>, window_params = [{transform_indices = @transform_0, window_bounds = array<i64: 1, 4, 384>}, {pipeline_mode = #tpu.pipeline_mode<synchronous>, transform_indices = @transform_1, window_bounds = array<i64: 32, 36>}, {pipeline_mode = #tpu.pipeline_mode<synchronous>, transform_indices = @transform_2, window_bounds = array<i64: 32, 1>}, {pipeline_mode = #tpu.pipeline_mode<synchronous>, transform_indices = @transform_3, window_bounds = array<i64: 4, 288>}, {pipeline_mode = #tpu.pipeline_mode<synchronous>, transform_indices = @transform_4, window_bounds = array<i64: 4, 1>}, {transform_indices = @transform_5, window_bounds = array<i64: 3>}, {pipeline_mode = #tpu.pipeline_mode<synchronous>, transform_indices = @transform_6, window_bounds = array<i64: 1, 384>}, {transform_indices = @transform_7, window_bounds = array<i64: 1, 4, 384>}]} {
    %c0 = arith.constant 0 : index
    %c0_0 = arith.constant 0 : index
    %0 = vector.load %arg7[%c0, %c0_0] : memref<1x384xf32, #tpu.memory_space<vmem>>, vector<1x384xf32>
    %c0_1 = arith.constant 0 : index
    %c0_2 = arith.constant 0 : index
    %c0_3 = arith.constant 0 : index
    %1 = vector.load %arg1[%c0_1, %c0_2, %c0_3] : memref<1x4x384xf32, #tpu.memory_space<vmem>>, vector<1x4x384xf32>
    %2 = vector.shape_cast %1 : vector<1x4x384xf32> to vector<4x384xf32>
    %c0_4 = arith.constant 0 : index
    %3 = memref.load %arg6[%c0_4] : memref<3xf32, #tpu.memory_space<smem>>
    %c19_i32 = arith.constant 19 : i32
    %4 = tpu.dynamic_rotate %2 by %c19_i32 dim 1 : vector<4x384xf32>, i32 -> vector<4x384xf32>
    %c0_5 = arith.constant 0 : index
    %c0_6 = arith.constant 0 : index
    %5 = vector.load %arg9[%c0_5, %c0_6] : memref<36x384xf32, #tpu.memory_space<vmem>>, vector<4x384xf32>
    tpu.vector_store %arg9[%c0_5, %c0_6], %4 {strides = array<i32>} : memref<36x384xf32, #tpu.memory_space<vmem>>, vector<4x384xf32>,
    %c18_i32 = arith.constant 18 : i32
    %6 = tpu.dynamic_rotate %2 by %c18_i32 dim 1 : vector<4x384xf32>, i32 -> vector<4x384xf32>
    %c4 = arith.constant 4 : index
    %c0_7 = arith.constant 0 : index
    %7 = vector.load %arg9[%c4, %c0_7] : memref<36x384xf32, #tpu.memory_space<vmem>>, vector<4x384xf32>
    tpu.vector_store %arg9[%c4, %c0_7], %6 {strides = array<i32>} : memref<36x384xf32, #tpu.memory_space<vmem>>, vector<4x384xf32>,
    %c17_i32 = arith.constant 17 : i32
    %8 = tpu.dynamic_rotate %2 by %c17_i32 dim 1 : vector<4x384xf32>, i32 -> vector<4x384xf32>
    %c8 = arith.constant 8 : index
    %c0_8 = arith.constant 0 : index
    %9 = vector.load %arg9[%c8, %c0_8] : memref<36x384xf32, #tpu.memory_space<vmem>>, vector<4x384xf32>
    tpu.vector_store %arg9[%c8, %c0_8], %8 {strides = array<i32>} : memref<36x384xf32, #tpu.memory_space<vmem>>, vector<4x384xf32>,
    %c1_i32 = arith.constant 1 : i32
    %10 = tpu.dynamic_rotate %2 by %c1_i32 dim 1 : vector<4x384xf32>, i32 -> vector<4x384xf32>
    %c12 = arith.constant 12 : index
    %c0_9 = arith.constant 0 : index
    %11 = vector.load %arg9[%c12, %c0_9] : memref<36x384xf32, #tpu.memory_space<vmem>>, vector<4x384xf32>
    tpu.vector_store %arg9[%c12, %c0_9], %10 {strides = array<i32>} : memref<36x384xf32, #tpu.memory_space<vmem>>, vector<4x384xf32>,
    %c16 = arith.constant 16 : index
    %c0_10 = arith.constant 0 : index
    %12 = vector.load %arg9[%c16, %c0_10] : memref<36x384xf32, #tpu.memory_space<vmem>>, vector<4x384xf32>
    tpu.vector_store %arg9[%c16, %c0_10], %2 {strides = array<i32>} : memref<36x384xf32, #tpu.memory_space<vmem>>, vector<4x384xf32>,
    %c383_i32 = arith.constant 383 : i32
    %13 = tpu.dynamic_rotate %2 by %c383_i32 dim 1 : vector<4x384xf32>, i32 -> vector<4x384xf32>
    %c20 = arith.constant 20 : index
    %c0_11 = arith.constant 0 : index
    %14 = vector.load %arg9[%c20, %c0_11] : memref<36x384xf32, #tpu.memory_space<vmem>>, vector<4x384xf32>
    tpu.vector_store %arg9[%c20, %c0_11], %13 {strides = array<i32>} : memref<36x384xf32, #tpu.memory_space<vmem>>, vector<4x384xf32>,
    %c367_i32 = arith.constant 367 : i32
    %15 = tpu.dynamic_rotate %2 by %c367_i32 dim 1 : vector<4x384xf32>, i32 -> vector<4x384xf32>
    %c24 = arith.constant 24 : index
    %c0_12 = arith.constant 0 : index
    %16 = vector.load %arg9[%c24, %c0_12] : memref<36x384xf32, #tpu.memory_space<vmem>>, vector<4x384xf32>
    tpu.vector_store %arg9[%c24, %c0_12], %15 {strides = array<i32>} : memref<36x384xf32, #tpu.memory_space<vmem>>, vector<4x384xf32>,
    %c366_i32 = arith.constant 366 : i32
    %17 = tpu.dynamic_rotate %2 by %c366_i32 dim 1 : vector<4x384xf32>, i32 -> vector<4x384xf32>
    %c28 = arith.constant 28 : index
    %c0_13 = arith.constant 0 : index
    %18 = vector.load %arg9[%c28, %c0_13] : memref<36x384xf32, #tpu.memory_space<vmem>>, vector<4x384xf32>
    tpu.vector_store %arg9[%c28, %c0_13], %17 {strides = array<i32>} : memref<36x384xf32, #tpu.memory_space<vmem>>, vector<4x384xf32>,
    %c365_i32 = arith.constant 365 : i32
    %19 = tpu.dynamic_rotate %2 by %c365_i32 dim 1 : vector<4x384xf32>, i32 -> vector<4x384xf32>
    %c32 = arith.constant 32 : index
    %c0_14 = arith.constant 0 : index
    %20 = vector.load %arg9[%c32, %c0_14] : memref<36x384xf32, #tpu.memory_space<vmem>>, vector<4x384xf32>
    tpu.vector_store %arg9[%c32, %c0_14], %19 {strides = array<i32>} : memref<36x384xf32, #tpu.memory_space<vmem>>, vector<4x384xf32>,
    %c0_15 = arith.constant 0 : index
    %c0_16 = arith.constant 0 : index
    %21 = vector.load %arg2[%c0_15, %c0_16] : memref<32x36xbf16, #tpu.memory_space<vmem>>, vector<32x36xbf16>
    %c0_17 = arith.constant 0 : index
    %c0_18 = arith.constant 0 : index
    %22 = vector.load %arg9[%c0_17, %c0_18] : memref<36x384xf32, #tpu.memory_space<vmem>>, vector<36x384xf32>
    %23 = arith.truncf %22 : vector<36x384xf32> to vector<36x384xbf16>
    %cst = arith.constant dense<0.000000e+00> : vector<32x384xf32>
    %24 = tpu.matmul %21, %23, %cst {dimension_numbers = #tpu.dot_dimension_numbers<[1], [0], [0], [1], [0, 0, 1, 1], [], []>} : vector<32x36xbf16>, vector<36x384xbf16>, vector<32x384xf32> -> vector<32x384xf32>
    %c0_19 = arith.constant 0 : index
    %c0_20 = arith.constant 0 : index
    %25 = vector.load %arg3[%c0_19, %c0_20] : memref<32x1xf32, #tpu.memory_space<vmem>>, vector<32x1xf32>
    %26 = vector.broadcast %25 : vector<32x1xf32> to vector<32x384xf32>
    %27 = arith.addf %24, %26 : vector<32x384xf32>
    %cst_21 = arith.constant 0.000000e+00 : f32
    %28 = vector.broadcast %cst_21 : f32 to vector<32x384xf32>
    %29 = arith.cmpf oge, %27, %28 : vector<32x384xf32>
    %30 = vector.broadcast %3 : f32 to vector<32x384xf32>
    %31 = arith.mulf %30, %27 : vector<32x384xf32>
    %32 = arith.select %29, %27, %31 : vector<32x384xi1>, vector<32x384xf32>
    %33 = vector.broadcast %0 : vector<1x384xf32> to vector<32x384xf32>
    %34 = arith.mulf %32, %33 : vector<32x384xf32>
    %c2 = arith.constant 2 : index
    %35 = memref.load %arg6[%c2] : memref<3xf32, #tpu.memory_space<smem>>
    %cst_22 = arith.constant dense<0.000000e+00> : vector<32x32xf32>
    %36 = tpu.matmul %34, %34, %cst_22 {dimension_numbers = #tpu.dot_dimension_numbers<[1], [1], [0], [0], [0, 0, 1, 0], [], []>} : vector<32x384xf32>, vector<32x384xf32>, vector<32x32xf32> -> vector<32x32xf32>
    %cst_23 = arith.constant 6.250000e-02 : f32
    %37 = vector.broadcast %cst_23 : f32 to vector<32x32xf32>
    %38 = arith.mulf %36, %37 : vector<32x32xf32>
    %cst_24 = arith.constant dense<0xFF800000> : vector<32xf32>
    %39 = vector.multi_reduction <maximumf>, %38, %cst_24 [1] : vector<32x32xf32> to vector<32xf32>
    %40 = vector.shape_cast %39 : vector<32xf32> to vector<32x1xf32>
    %41 = vector.broadcast %40 : vector<32x1xf32> to vector<32x32xf32>
    %42 = arith.subf %41, %38 : vector<32x32xf32>
    %cst_25 = arith.constant dense<0xFF800000> : vector<32xf32>
    %43 = vector.multi_reduction <maximumf>, %42, %cst_25 [1] : vector<32x32xf32> to vector<32xf32>
    %44 = vector.shape_cast %43 : vector<32xf32> to vector<32x1xf32>
    %45 = vector.broadcast %44 : vector<32x1xf32> to vector<32x32xf32>
    %46 = arith.subf %42, %45 : vector<32x32xf32>
    %47 = math.exp %46 : vector<32x32xf32>
    %cst_26 = arith.constant dense<0.000000e+00> : vector<32xf32>
    %48 = vector.multi_reduction <add>, %47, %cst_26 [1] : vector<32x32xf32> to vector<32xf32>
    %49 = vector.shape_cast %48 : vector<32xf32> to vector<32x1xf32>
    %50 = vector.broadcast %49 : vector<32x1xf32> to vector<32x32xf32>
    %51 = arith.divf %47, %50 : vector<32x32xf32>
    %cst_27 = arith.constant dense<0.000000e+00> : vector<32x384xf32>
    %52 = tpu.matmul %51, %34, %cst_27 {dimension_numbers = #tpu.dot_dimension_numbers<[1], [0], [0], [1], [0, 0, 1, 1], [], []>} : vector<32x32xf32>, vector<32x384xf32>, vector<32x384xf32> -> vector<32x384xf32>
    %53 = vector.broadcast %35 : f32 to vector<32x384xf32>
    %54 = arith.mulf %53, %52 : vector<32x384xf32>
    %55 = arith.addf %54, %34 : vector<32x384xf32>
    %c1 = arith.constant 1 : index
    %56 = memref.load %arg6[%c1] : memref<3xf32, #tpu.memory_space<smem>>
    %c19_i32_28 = arith.constant 19 : i32
    %57 = tpu.dynamic_rotate %55 by %c19_i32_28 dim 1 : vector<32x384xf32>, i32 -> vector<32x384xf32>
    %c0_29 = arith.constant 0 : index
    %c0_30 = arith.constant 0 : index
    %58 = vector.load %arg10[%c0_29, %c0_30] : memref<288x384xf32, #tpu.memory_space<vmem>>, vector<32x384xf32>
    tpu.vector_store %arg10[%c0_29, %c0_30], %57 {strides = array<i32>} : memref<288x384xf32, #tpu.memory_space<vmem>>, vector<32x384xf32>,
    %c18_i32_31 = arith.constant 18 : i32
    %59 = tpu.dynamic_rotate %55 by %c18_i32_31 dim 1 : vector<32x384xf32>, i32 -> vector<32x384xf32>
    %c32_32 = arith.constant 32 : index
    %c0_33 = arith.constant 0 : index
    %60 = vector.load %arg10[%c32_32, %c0_33] : memref<288x384xf32, #tpu.memory_space<vmem>>, vector<32x384xf32>
    tpu.vector_store %arg10[%c32_32, %c0_33], %59 {strides = array<i32>} : memref<288x384xf32, #tpu.memory_space<vmem>>, vector<32x384xf32>,
    %c17_i32_34 = arith.constant 17 : i32
    %61 = tpu.dynamic_rotate %55 by %c17_i32_34 dim 1 : vector<32x384xf32>, i32 -> vector<32x384xf32>
    %c64 = arith.constant 64 : index
    %c0_35 = arith.constant 0 : index
    %62 = vector.load %arg10[%c64, %c0_35] : memref<288x384xf32, #tpu.memory_space<vmem>>, vector<32x384xf32>
    tpu.vector_store %arg10[%c64, %c0_35], %61 {strides = array<i32>} : memref<288x384xf32, #tpu.memory_space<vmem>>, vector<32x384xf32>,
    %c1_i32_36 = arith.constant 1 : i32
    %63 = tpu.dynamic_rotate %55 by %c1_i32_36 dim 1 : vector<32x384xf32>, i32 -> vector<32x384xf32>
    %c96 = arith.constant 96 : index
    %c0_37 = arith.constant 0 : index
    %64 = vector.load %arg10[%c96, %c0_37] : memref<288x384xf32, #tpu.memory_space<vmem>>, vector<32x384xf32>
    tpu.vector_store %arg10[%c96, %c0_37], %63 {strides = array<i32>} : memref<288x384xf32, #tpu.memory_space<vmem>>, vector<32x384xf32>,
    %c128 = arith.constant 128 : index
    %c0_38 = arith.constant 0 : index
    %65 = vector.load %arg10[%c128, %c0_38] : memref<288x384xf32, #tpu.memory_space<vmem>>, vector<32x384xf32>
    tpu.vector_store %arg10[%c128, %c0_38], %55 {strides = array<i32>} : memref<288x384xf32, #tpu.memory_space<vmem>>, vector<32x384xf32>,
    %c383_i32_39 = arith.constant 383 : i32
    %66 = tpu.dynamic_rotate %55 by %c383_i32_39 dim 1 : vector<32x384xf32>, i32 -> vector<32x384xf32>
    %c160 = arith.constant 160 : index
    %c0_40 = arith.constant 0 : index
    %67 = vector.load %arg10[%c160, %c0_40] : memref<288x384xf32, #tpu.memory_space<vmem>>, vector<32x384xf32>
    tpu.vector_store %arg10[%c160, %c0_40], %66 {strides = array<i32>} : memref<288x384xf32, #tpu.memory_space<vmem>>, vector<32x384xf32>,
    %c367_i32_41 = arith.constant 367 : i32
    %68 = tpu.dynamic_rotate %55 by %c367_i32_41 dim 1 : vector<32x384xf32>, i32 -> vector<32x384xf32>
    %c192 = arith.constant 192 : index
    %c0_42 = arith.constant 0 : index
    %69 = vector.load %arg10[%c192, %c0_42] : memref<288x384xf32, #tpu.memory_space<vmem>>, vector<32x384xf32>
    tpu.vector_store %arg10[%c192, %c0_42], %68 {strides = array<i32>} : memref<288x384xf32, #tpu.memory_space<vmem>>, vector<32x384xf32>,
    %c366_i32_43 = arith.constant 366 : i32
    %70 = tpu.dynamic_rotate %55 by %c366_i32_43 dim 1 : vector<32x384xf32>, i32 -> vector<32x384xf32>
    %c224 = arith.constant 224 : index
    %c0_44 = arith.constant 0 : index
    %71 = vector.load %arg10[%c224, %c0_44] : memref<288x384xf32, #tpu.memory_space<vmem>>, vector<32x384xf32>
    tpu.vector_store %arg10[%c224, %c0_44], %70 {strides = array<i32>} : memref<288x384xf32, #tpu.memory_space<vmem>>, vector<32x384xf32>,
    %c365_i32_45 = arith.constant 365 : i32
    %72 = tpu.dynamic_rotate %55 by %c365_i32_45 dim 1 : vector<32x384xf32>, i32 -> vector<32x384xf32>
    %c256 = arith.constant 256 : index
    %c0_46 = arith.constant 0 : index
    %73 = vector.load %arg10[%c256, %c0_46] : memref<288x384xf32, #tpu.memory_space<vmem>>, vector<32x384xf32>
    tpu.vector_store %arg10[%c256, %c0_46], %72 {strides = array<i32>} : memref<288x384xf32, #tpu.memory_space<vmem>>, vector<32x384xf32>,
    %c0_47 = arith.constant 0 : index
    %c0_48 = arith.constant 0 : index
    %74 = vector.load %arg4[%c0_47, %c0_48] : memref<4x288xbf16, #tpu.memory_space<vmem>>, vector<4x288xbf16>
    %c0_49 = arith.constant 0 : index
    %c0_50 = arith.constant 0 : index
    %75 = vector.load %arg10[%c0_49, %c0_50] : memref<288x384xf32, #tpu.memory_space<vmem>>, vector<288x384xf32>
    %76 = arith.truncf %75 : vector<288x384xf32> to vector<288x384xbf16>
    %cst_51 = arith.constant dense<0.000000e+00> : vector<4x384xf32>
    %77 = tpu.matmul %74, %76, %cst_51 {dimension_numbers = #tpu.dot_dimension_numbers<[1], [0], [0], [1], [0, 0, 1, 1], [], []>} : vector<4x288xbf16>, vector<288x384xbf16>, vector<4x384xf32> -> vector<4x384xf32>
    %c0_52 = arith.constant 0 : index
    %c0_53 = arith.constant 0 : index
    %78 = vector.load %arg5[%c0_52, %c0_53] : memref<4x1xf32, #tpu.memory_space<vmem>>, vector<4x1xf32>
    %79 = vector.broadcast %78 : vector<4x1xf32> to vector<4x384xf32>
    %80 = arith.addf %77, %79 : vector<4x384xf32>
    %cst_54 = arith.constant 0.000000e+00 : f32
    %81 = vector.broadcast %cst_54 : f32 to vector<4x384xf32>
    %82 = arith.cmpf oge, %80, %81 : vector<4x384xf32>
    %83 = vector.broadcast %56 : f32 to vector<4x384xf32>
    %84 = arith.mulf %83, %80 : vector<4x384xf32>
    %85 = arith.select %82, %80, %84 : vector<4x384xi1>, vector<4x384xf32>
    %86 = vector.broadcast %0 : vector<1x384xf32> to vector<4x384xf32>
    %87 = arith.mulf %85, %86 : vector<4x384xf32>
    %c0_55 = arith.constant 0 : index
    %c0_56 = arith.constant 0 : index
    %c0_57 = arith.constant 0 : index
    %88 = vector.load %arg8[%c0_55, %c0_56, %c0_57] : memref<1x4x384xf32, #tpu.memory_space<vmem>>, vector<1x4x384xf32>
    %89 = vector.shape_cast %88 : vector<1x4x384xf32> to vector<4x384xf32>
    %90 = vector.shape_cast %87 : vector<4x384xf32> to vector<1x4x384xf32>
    tpu.vector_store %arg8[%c0_55, %c0_56, %c0_57], %90 {strides = array<i32>} : memref<1x4x384xf32, #tpu.memory_space<vmem>>, vector<1x4x384xf32>,
    return
  }
  func.func @transform_0(%arg0: i32) -> (i32, i32, i32) {
    %c0_i32 = arith.constant 0 : i32
    %c0_i32_0 = arith.constant 0 : i32
    %c0_i32_1 = arith.constant 0 : i32
    return %arg0, %c0_i32, %c0_i32_0 : i32, i32, i32
  }
  func.func @transform_1(%arg0: i32) -> (i32, i32) {
    %c0_i32 = arith.constant 0 : i32
    %c0_i32_0 = arith.constant 0 : i32
    %c0_i32_1 = arith.constant 0 : i32
    return %c0_i32, %c0_i32_0 : i32, i32
  }
  func.func @transform_2(%arg0: i32) -> (i32, i32) {
    %c0_i32 = arith.constant 0 : i32
    %c0_i32_0 = arith.constant 0 : i32
    %c0_i32_1 = arith.constant 0 : i32
    return %c0_i32, %c0_i32_0 : i32, i32
  }
  func.func @transform_3(%arg0: i32) -> (i32, i32) {
    %c0_i32 = arith.constant 0 : i32
    %c0_i32_0 = arith.constant 0 : i32
    %c0_i32_1 = arith.constant 0 : i32
    return %c0_i32, %c0_i32_0 : i32, i32
  }
  func.func @transform_4(%arg0: i32) -> (i32, i32) {
    %c0_i32 = arith.constant 0 : i32
    %c0_i32_0 = arith.constant 0 : i32
    %c0_i32_1 = arith.constant 0 : i32
    return %c0_i32, %c0_i32_0 : i32, i32
  }
  func.func @transform_5(%arg0: i32) -> i32 {
    %c0_i32 = arith.constant 0 : i32
    %c0_i32_0 = arith.constant 0 : i32
    return %c0_i32 : i32
  }
  func.func @transform_6(%arg0: i32) -> (i32, i32) {
    %c0_i32 = arith.constant 0 : i32
    %c0_i32_0 = arith.constant 0 : i32
    %c0_i32_1 = arith.constant 0 : i32
    return %c0_i32, %c0_i32_0 : i32, i32
  }
  func.func @transform_7(%arg0: i32) -> (i32, i32, i32) {
    %c0_i32 = arith.constant 0 : i32
    %c0_i32_0 = arith.constant 0 : i32
    %c0_i32_1 = arith.constant 0 : i32
    return %arg0, %c0_i32, %c0_i32_0 : i32, i32, i32
  }
}

</mosaic_0001>

<llo_original>
// kernel: conv_cam_layer_forward.1
$region0: #{conv_cam_layer_forward.1}
  #allocation0 [shape = 'u32[]', space=smem, size = 0x4, offset = 0x4, fixed_abs, tag = 'smem constant byte address 0x4 - core index']
  #allocation1 [shape = 'u32[144,128]{1,0:T(1,128)}', space=vmem, size = 0x12000, scoped, tag = 'internal scratch']
  #allocation2 [shape = 'f32[36,384]{1,0:T(8,128)}', space=vmem, size = 0xf000, scoped, tag = 'scratch operand']
  #allocation3 [shape = 'f32[288,384]{1,0:T(8,128)}', space=vmem, size = 0x6c000, scoped, tag = 'scratch operand']
  %s0 = inlined_call_operand.vmem [shape: f32[2,4,384], index: 0, kind: input, shape index: {}]
  %s1 = inlined_call_operand.vmem [shape: bf16[32,36], index: 1, kind: input, shape index: {}]
  %s2 = inlined_call_operand.vmem [shape: f32[32,1], index: 2, kind: input, shape index: {}]
  %s3 = inlined_call_operand.vmem [shape: bf16[4,288], index: 3, kind: input, shape index: {}]
  %s4 = inlined_call_operand.vmem [shape: f32[4,1], index: 4, kind: input, shape index: {}]
  %s5 = inlined_call_operand.vmem [shape: f32[3], index: 5, kind: input, shape index: {}]
  %s6 = inlined_call_operand.vmem [shape: f32[1,384], index: 6, kind: input, shape index: {}]
  %s7 = inlined_call_operand.vmem [shape: f32[2,4,384], index: 7, kind: output, shape index: {}]
  %s8 = sld [smem:[#allocation0]]
  $region65: #{conv_cam_layer_forward.1} parent=0
    _
  %s10 = ssub.s32 1, %s8
  %s11 = scalar_select 0, %s10, %s8
  $region1: #{conv_cam_layer_forward.1} parent=0
    #allocation4 [shape = 'u8[512]{0}', space=smem, size = 0x200, scoped, tag = 'input window, operand 5, single buffered']
    #allocation5 [shape = 's32[2]{0}', space=sflag, size = 0x8, scoped, tag = 'scoped memory for conv_cam_layer_forward.1']
    %12 = vsyncpa [#allocation5], 0
    loop: start=0, step=1, limit=4
    $region2: #{conv_cam_layer_forward.1} parent=1 // loop_pre_header
      _
    $region3: #{conv_cam_layer_forward.1} parent=1 // loop_header
      %s14 = sphi 0, %s18
      %p15 = scmp.ge.s32.totalorder %s14, 4
      %s24 = sphi 0, %s26
      %s27 = sphi 0, %s24
      %s28 = sphi 0, %s27
      %s44 = sphi 0, %s28
      %s48 = sphi 0, %s48
      %s50 = sphi 0, %s48
      %s51 = sphi 0, %s50
      %s65 = sphi 0, %s51
      %s69 = sphi 0, %s69
      %s71 = sphi 0, %s69
      %s72 = sphi 0, %s71
      %s86 = sphi 0, %s72
      %s90 = sphi 0, %s90
      %s92 = sphi 0, %s90
      %s93 = sphi 0, %s92
      %s107 = sphi 0, %s93
      %s111 = sphi 0, %s111
      %s113 = sphi 0, %s111
      %s114 = sphi 0, %s113
      %s128 = sphi 0, %s114
      %s132 = sphi 0, %s132
      %s134 = sphi 0, %s132
      %s135 = sphi 0, %s134
      %s149 = sphi 0, %s135
      %s153 = sphi 0, %s153
      %s155 = sphi 0, %s153
      %s156 = sphi 0, %s155
      %s170 = sphi 0, %s156
      %s176 = sphi 0, %s178
      %s179 = sphi 0, %s176
      %s180 = sphi 0, %s179
      %s196 = sphi 0, %s180
    $region4: #{conv_cam_layer_forward.1} parent=1 // loop_header_branch
      %17 = sbr.rel (%p15) target = $region8
    $region5: #{conv_cam_layer_forward.1} parent=1 // loop_body
      %s19 = ssub.s32 %s14, 1
      %s20 = ssub.s32 %s14, 2
      %s21 = sadd.s32 %s14, 1
      %s22 = ssub.s32 %s14, %s21
      %p23 = scmp.eq.s32.totalorder %s22, 0
      %s25 = sadd.s32 %s24, 1
      %s26 = scalar_select %p23, %s24, %s25
      %p29 = pneg %p23
      %p30 = scmp.eq.s32.totalorder %s14, 1
      %p31 = por %p29, %p30
      %p32 = scmp.ne.s32.totalorder %s24, %s27
      %p33 = scmp.eq.s32.totalorder %s14, 0
      %p34 = por %p32, %p33
      %p35 = scmp.ne.s32.totalorder %s24, %s27
      %p36 = scmp.eq.s32.totalorder %s19, 1
      %p37 = por %p35, %p36
      %p38 = scmp.ne.s32.totalorder %s27, %s28
      %p39 = scmp.eq.s32.totalorder %s19, 0
      %p40 = por %p38, %p39
      %p41 = scmp.ne.s32.totalorder %s27, %s28
      %p42 = scmp.eq.s32.totalorder %s20, 1
      %p43 = por %p41, %p42
      %p45 = scmp.ne.s32.totalorder %s28, %s44
      %p46 = scmp.eq.s32.totalorder %s20, 0
      %p47 = por %p45, %p46
      %s49 = sadd.s32 %s48, 1
      %p52 = scmp.eq.s32.totalorder %s14, 1
      %p53 = scmp.ne.s32.totalorder %s48, %s50
      %p54 = scmp.eq.s32.totalorder %s14, 0
      %p55 = por %p53, %p54
      %p56 = scmp.ne.s32.totalorder %s48, %s50
      %p57 = scmp.eq.s32.totalorder %s19, 1
      %p58 = por %p56, %p57
      %p59 = scmp.ne.s32.totalorder %s50, %s51
      %p60 = scmp.eq.s32.totalorder %s19, 0
      %p61 = por %p59, %p60
      %p62 = scmp.ne.s32.totalorder %s50, %s51
      %p63 = scmp.eq.s32.totalorder %s20, 1
      %p64 = por %p62, %p63
      %p66 = scmp.ne.s32.totalorder %s51, %s65
      %p67 = scmp.eq.s32.totalorder %s20, 0
      %p68 = por %p66, %p67
      %s70 = sadd.s32 %s69, 1
      %p73 = scmp.eq.s32.totalorder %s14, 1
      %p74 = scmp.ne.s32.totalorder %s69, %s71
      %p75 = scmp.eq.s32.totalorder %s14, 0
      %p76 = por %p74, %p75
      %p77 = scmp.ne.s32.totalorder %s69, %s71
      %p78 = scmp.eq.s32.totalorder %s19, 1
      %p79 = por %p77, %p78
      %p80 = scmp.ne.s32.totalorder %s71, %s72
      %p81 = scmp.eq.s32.totalorder %s19, 0
      %p82 = por %p80, %p81
      %p83 = scmp.ne.s32.totalorder %s71, %s72
      %p84 = scmp.eq.s32.totalorder %s20, 1
      %p85 = por %p83, %p84
      %p87 = scmp.ne.s32.totalorder %s72, %s86
      %p88 = scmp.eq.s32.totalorder %s20, 0
      %p89 = por %p87, %p88
      %s91 = sadd.s32 %s90, 1
      %p94 = scmp.eq.s32.totalorder %s14, 1
      %p95 = scmp.ne.s32.totalorder %s90, %s92
      %p96 = scmp.eq.s32.totalorder %s14, 0
      %p97 = por %p95, %p96
      %p98 = scmp.ne.s32.totalorder %s90, %s92
      %p99 = scmp.eq.s32.totalorder %s19, 1
      %p100 = por %p98, %p99
      %p101 = scmp.ne.s32.totalorder %s92, %s93
      %p102 = scmp.eq.s32.totalorder %s19, 0
      %p103 = por %p101, %p102
      %p104 = scmp.ne.s32.totalorder %s92, %s93
      %p105 = scmp.eq.s32.totalorder %s20, 1
      %p106 = por %p104, %p105
      %p108 = scmp.ne.s32.totalorder %s93, %s107
      %p109 = scmp.eq.s32.totalorder %s20, 0
      %p110 = por %p108, %p109
      %s112 = sadd.s32 %s111, 1
      %p115 = scmp.eq.s32.totalorder %s14, 1
      %p116 = scmp.ne.s32.totalorder %s111, %s113
      %p117 = scmp.eq.s32.totalorder %s14, 0
      %p118 = por %p116, %p117
      %p119 = scmp.ne.s32.totalorder %s111, %s113
      %p120 = scmp.eq.s32.totalorder %s19, 1
      %p121 = por %p119, %p120
      %p122 = scmp.ne.s32.totalorder %s113, %s114
      %p123 = scmp.eq.s32.totalorder %s19, 0
      %p124 = por %p122, %p123
      %p125 = scmp.ne.s32.totalorder %s113, %s114
      %p126 = scmp.eq.s32.totalorder %s20, 1
      %p127 = por %p125, %p126
      %p129 = scmp.ne.s32.totalorder %s114, %s128
      %p130 = scmp.eq.s32.totalorder %s20, 0
      %p131 = por %p129, %p130
      %s133 = sadd.s32 %s132, 1
      %p136 = scmp.eq.s32.totalorder %s14, 1
      %p137 = scmp.ne.s32.totalorder %s132, %s134
      %p138 = scmp.eq.s32.totalorder %s14, 0
      %p139 = por %p137, %p138
      %p140 = scmp.ne.s32.totalorder %s132, %s134
      %p141 = scmp.eq.s32.totalorder %s19, 1
      %p142 = por %p140, %p141
      %p143 = scmp.ne.s32.totalorder %s134, %s135
      %p144 = scmp.eq.s32.totalorder %s19, 0
      %p145 = por %p143, %p144
      %p146 = scmp.ne.s32.totalorder %s134, %s135
      %p147 = scmp.eq.s32.totalorder %s20, 1
      %p148 = por %p146, %p147
      %p150 = scmp.ne.s32.totalorder %s135, %s149
      %p151 = scmp.eq.s32.totalorder %s20, 0
      %p152 = por %p150, %p151
      %s154 = sadd.s32 %s153, 1
      %p157 = scmp.eq.s32.totalorder %s14, 1
      %p158 = scmp.ne.s32.totalorder %s153, %s155
      %p159 = scmp.eq.s32.totalorder %s14, 0
      %p160 = por %p158, %p159
      %p161 = scmp.ne.s32.totalorder %s153, %s155
      %p162 = scmp.eq.s32.totalorder %s19, 1
      %p163 = por %p161, %p162
      %p164 = scmp.ne.s32.totalorder %s155, %s156
      %p165 = scmp.eq.s32.totalorder %s19, 0
      %p166 = por %p164, %p165
      %p167 = scmp.ne.s32.totalorder %s155, %s156
      %p168 = scmp.eq.s32.totalorder %s20, 1
      %p169 = por %p167, %p168
      %p171 = scmp.ne.s32.totalorder %s156, %s170
      %p172 = scmp.eq.s32.totalorder %s20, 0
      %p173 = por %p171, %p172
      %s174 = ssub.s32 %s14, %s21
      %p175 = scmp.eq.s32.totalorder %s174, 0
      %s177 = sadd.s32 %s176, 1
      %s178 = scalar_select %p175, %s176, %s177
      %p181 = pneg %p175
      %p182 = scmp.eq.s32.totalorder %s14, 1
      %p183 = por %p181, %p182
      %p184 = scmp.ne.s32.totalorder %s176, %s179
      %p185 = scmp.eq.s32.totalorder %s14, 0
      %p186 = por %p184, %p185
      %p187 = scmp.ne.s32.totalorder %s176, %s179
      %p188 = scmp.eq.s32.totalorder %s19, 1
      %p189 = por %p187, %p188
      %p190 = scmp.ne.s32.totalorder %s179, %s180
      %p191 = scmp.eq.s32.totalorder %s19, 0
      %p192 = por %p190, %p191
      %p193 = scmp.ne.s32.totalorder %s179, %s180
      %p194 = scmp.eq.s32.totalorder %s20, 1
      %p195 = por %p193, %p194
      %p197 = scmp.ne.s32.totalorder %s180, %s196
      %p198 = scmp.eq.s32.totalorder %s20, 0
      %p199 = por %p197, %p198
      %p200 = scmp.le.s32.totalorder 1, %s14
      %p201 = scmp.lt.s32.totalorder %s14, 3
      %p202 = pnand %p200, %p201
      %p203 = pneg %p202
      // Predicated region
      $region9: #{conv_cam_layer_forward.1} parent=5 // pred_check
        _
      $region10: #{conv_cam_layer_forward.1} parent=5 // pred_check_branch
        %205 = sbr.rel (%p202) target = $region12
      $region11: #{conv_cam_layer_forward.1} parent=5 // pred_region
        %s206 = ssub.s32 %s14, 1
        // Predicated region
        $region13: #{conv_cam_layer_forward.1} parent=11 // pred_check
          %p207 = pneg %p61
        $region14: #{conv_cam_layer_forward.1} parent=11 // pred_check_branch
          %209 = sbr.rel (%p207) target = $region16
        $region15: #{conv_cam_layer_forward.1} parent=11 // pred_region
          _
        $region16: #{conv_cam_layer_forward.1} parent=11 // pred_fallthru
          _
        // Predicated region
        $region17: #{conv_cam_layer_forward.1} parent=11 // pred_check
          %p210 = pneg %p82
        $region18: #{conv_cam_layer_forward.1} parent=11 // pred_check_branch
          %212 = sbr.rel (%p210) target = $region20
        $region19: #{conv_cam_layer_forward.1} parent=11 // pred_region
          _
        $region20: #{conv_cam_layer_forward.1} parent=11 // pred_fallthru
          _
        // Predicated region
        $region21: #{conv_cam_layer_forward.1} parent=11 // pred_check
          %p213 = pneg %p103
        $region22: #{conv_cam_layer_forward.1} parent=11 // pred_check_branch
          %215 = sbr.rel (%p213) target = $region24
        $region23: #{conv_cam_layer_forward.1} parent=11 // pred_region
          _
        $region24: #{conv_cam_layer_forward.1} parent=11 // pred_fallthru
          _
        // Predicated region
        $region25: #{conv_cam_layer_forward.1} parent=11 // pred_check
          %p216 = pneg %p124
        $region26: #{conv_cam_layer_forward.1} parent=11 // pred_check_branch
          %218 = sbr.rel (%p216) target = $region28
        $region27: #{conv_cam_layer_forward.1} parent=11 // pred_region
          _
        $region28: #{conv_cam_layer_forward.1} parent=11 // pred_fallthru
          _
        // Predicated region
        $region29: #{conv_cam_layer_forward.1} parent=11 // pred_check
          %p219 = pneg %p145
        $region30: #{conv_cam_layer_forward.1} parent=11 // pred_check_branch
          %221 = sbr.rel (%p219) target = $region32
        $region31: #{conv_cam_layer_forward.1} parent=11 // pred_region
          %s223 = ssub.s32 16, 16
          %224 = vsyncadd [#allocation5], %s223
          %s226 = sshll.u32 %s5, 4
          %s227 = int_to_ptr.vmem [resolvable:$true] %s226
          %229 = dma.vmem_to_smem %s227, 16, [#allocation4], [#allocation5]
        $region32: #{conv_cam_layer_forward.1} parent=11 // pred_fallthru
          _
        // Predicated region
        $region33: #{conv_cam_layer_forward.1} parent=11 // pred_check
          %p230 = pneg %p166
        $region34: #{conv_cam_layer_forward.1} parent=11 // pred_check_branch
          %232 = sbr.rel (%p230) target = $region36
        $region35: #{conv_cam_layer_forward.1} parent=11 // pred_region
          _
        $region36: #{conv_cam_layer_forward.1} parent=11 // pred_fallthru
          _
      $region12: #{conv_cam_layer_forward.1} parent=5 // pred_fallthru
        _
      %p233 = scmp.lt.s32.totalorder %s14, 2
      // Predicated region
      $region37: #{conv_cam_layer_forward.1} parent=5 // pred_check
        %p234 = pneg %p233
      $region38: #{conv_cam_layer_forward.1} parent=5 // pred_check_branch
        %236 = sbr.rel (%p234) target = $region40
      $region39: #{conv_cam_layer_forward.1} parent=5 // pred_region
        // Predicated region
        $region41: #{conv_cam_layer_forward.1} parent=39 // pred_check
          %p237 = pneg %p34
        $region42: #{conv_cam_layer_forward.1} parent=39 // pred_check_branch
          %239 = sbr.rel (%p237) target = $region44
        $region43: #{conv_cam_layer_forward.1} parent=39 // pred_region
          %p240 = scmp.lt.s32.totalorder %s14, 1
          %s241 = scalar_select %p240, %s14, 1
          %s242 = smul.addr %s241, 3
          %s243 = smul.addr %s242, 4
          %s244 = scalar_lea.vmem %s0, %s243
        $region44: #{conv_cam_layer_forward.1} parent=39 // pred_fallthru
          _
      $region40: #{conv_cam_layer_forward.1} parent=5 // pred_fallthru
        _
      %p245 = scmp.le.s32.totalorder 1, %s14
      %p246 = scmp.lt.s32.totalorder %s14, 3
      %p247 = pnand %p245, %p246
      %p248 = pneg %p247
      // Predicated region
      $region45: #{conv_cam_layer_forward.1} parent=5 // pred_check
        _
      $region46: #{conv_cam_layer_forward.1} parent=5 // pred_check_branch
        %250 = sbr.rel (%p247) target = $region48
      $region47: #{conv_cam_layer_forward.1} parent=5 // pred_region
        %s251 = ssub.s32 %s14, 1
        // Predicated region
        $region49: #{conv_cam_layer_forward.1} parent=47 // pred_check
          %p252 = pneg %p145
        $region50: #{conv_cam_layer_forward.1} parent=47 // pred_check_branch
          %254 = sbr.rel (%p252) target = $region52
        $region51: #{conv_cam_layer_forward.1} parent=47 // pred_region
          %255 = dma.done [#allocation5], 16
        $region52: #{conv_cam_layer_forward.1} parent=47 // pred_fallthru
          _
        %256 = sfence
        %p257 = scmp.lt.s32.totalorder %s19, 1
        %s258 = scalar_select %p257, %s19, 1
        %s259 = smul.addr %s258, 3
        %s260 = smul.addr %s259, 4
        %s261 = scalar_lea.vmem %s0, %s260
        %p262 = pneg %p40
        %p263 = pneg %p37
        %p264 = pneg %p61
        %p265 = pneg %p58
        %p266 = pneg %p82
        %p267 = pneg %p79
        %p268 = pneg %p103
        %p269 = pneg %p100
        %p270 = pneg %p124
        %p271 = pneg %p121
        %p272 = pneg %p145
        %p273 = pneg %p142
        %p274 = pneg %p166
        %p275 = pneg %p163
        %p276 = pneg %p192
        %p277 = pneg %p189
        %p278 = scmp.lt.s32.totalorder %s19, 1
        %s279 = scalar_select %p278, %s19, 1
        %s280 = smul.addr %s279, 3
        %s281 = smul.addr %s280, 4
        %s282 = scalar_lea.vmem %s7, %s281
        %p283 = scmp.lt.s32.totalorder %s19, 1
        %s284 = scalar_select %p283, %s19, 1
        %s285 = smul.addr %s284, 3
        %s286 = smul.addr %s285, 4
        %s287 = scalar_lea.vmem %s0, %s286
        %p288 = scmp.lt.s32.totalorder %s19, 1
        %s289 = scalar_select %p288, %s19, 1
        %s290 = smul.addr %s289, 3
        %s291 = smul.addr %s290, 4
        %s292 = scalar_lea.vmem %s7, %s291
        %v294 = vld [vmem:[%s6] sm:$0x7]
        %v295 = vld [vmem:[%s287] sm:$0xff]
        %v296 = vld [vmem:[%s287 + $0x8] sm:$0xf]
        %s297 = sld [smem:[#allocation4]]
        %v299 = vcombine.high %v295, %v295
        %301 = vrot.lane.b32.xlu0 %v295, 19
        %v302 = vpop.permute.xlu0 %301
        %303 = vrot.lane.b32.xlu0 %v299, 19
        %v304 = vpop.permute.xlu0 %303
        %305 = vrot.lane.b32.xlu0 %v296, 19
        %v306 = vpop.permute.xlu0 %305
        %v307 = vlaneseq
        %v308 = vand.u32 %v307, 127
        %vm309 = vcmp.lt.s32.totalorder %v308, 19
        %v310 = vsel %vm309, %v304, %v306
        %v311 = vsel %vm309, %v302, %v304
        %v312 = vsel %vm309, %v306, %v302
        %313 = vst [vmem:[#allocation2] sm:$0xf] %v312
        %314 = vst [vmem:[#allocation2 + $0x8] sm:$0xf] %v311
        %315 = vst [vmem:[#allocation2 + $0x10] sm:$0xf] %v310
        %316 = vrot.lane.b32.xlu0 %v295, 18
        %v317 = vpop.permute.xlu0 %316
        %318 = vrot.lane.b32.xlu0 %v299, 18
        %v319 = vpop.permute.xlu0 %318
        %320 = vrot.lane.b32.xlu0 %v296, 18
        %v321 = vpop.permute.xlu0 %320
        %vm322 = vcmp.lt.s32.totalorder %v308, 18
        %v323 = vsel %vm322, %v319, %v321
        %v324 = vsel %vm322, %v317, %v319
        %v325 = vsel %vm322, %v321, %v317
        %v329 = vrot.slane %v325, 4
        %v330 = vrot.slane %v324, 4
        %v331 = vrot.slane %v323, 4
        %335 = vst [vmem:[#allocation2] sm:$0xf0] %v329
        %336 = vst [vmem:[#allocation2 + $0x8] sm:$0xf0] %v330
        %337 = vst [vmem:[#allocation2 + $0x10] sm:$0xf0] %v331
        %338 = vrot.lane.b32.xlu0 %v295, 17
        %v339 = vpop.permute.xlu0 %338
        %340 = vrot.lane.b32.xlu0 %v299, 17
        %v341 = vpop.permute.xlu0 %340
        %342 = vrot.lane.b32.xlu0 %v296, 17
        %v343 = vpop.permute.xlu0 %342
        %vm344 = vcmp.lt.s32.totalorder %v308, 17
        %v345 = vsel %vm344, %v341, %v343
        %v346 = vsel %vm344, %v339, %v341
        %v347 = vsel %vm344, %v343, %v339
        %348 = vst [vmem:[#allocation2 + $0x18] sm:$0xf] %v347
        %349 = vst [vmem:[#allocation2 + $0x20] sm:$0xf] %v346
        %350 = vst [vmem:[#allocation2 + $0x28] sm:$0xf] %v345
        %351 = vrot.lane.b32.xlu0 %v295, 1
        %v352 = vpop.permute.xlu0 %351
        %353 = vrot.lane.b32.xlu0 %v299, 1
        %v354 = vpop.permute.xlu0 %353
        %355 = vrot.lane.b32.xlu0 %v296, 1
        %v356 = vpop.permute.xlu0 %355
        %vm357 = vcmp.lt.s32.totalorder %v308, 1
        %v358 = vsel %vm357, %v354, %v356
        %v359 = vsel %vm357, %v352, %v354
        %v360 = vsel %vm357, %v356, %v352
        %v364 = vrot.slane %v360, 4
        %v365 = vrot.slane %v359, 4
        %v366 = vrot.slane %v358, 4
        %370 = vst [vmem:[#allocation2 + $0x18] sm:$0xf0] %v364
        %371 = vst [vmem:[#allocation2 + $0x20] sm:$0xf0] %v365
        %372 = vst [vmem:[#allocation2 + $0x28] sm:$0xf0] %v366
        %373 = vst [vmem:[#allocation2 + $0x30] sm:$0xf] %v295
        %374 = vst [vmem:[#allocation2 + $0x38] sm:$0xf] %v299
        %375 = vst [vmem:[#allocation2 + $0x40] sm:$0xf] %v296
        %376 = vrot.lane.b32.xlu0 %v295, 127
        %v377 = vpop.permute.xlu0 %376
        %378 = vrot.lane.b32.xlu0 %v299, 127
        %v379 = vpop.permute.xlu0 %378
        %380 = vrot.lane.b32.xlu0 %v296, 127
        %v381 = vpop.permute.xlu0 %380
        %vm382 = vcmp.lt.s32.totalorder %v308, 127
        %v383 = vsel %vm382, %v379, %v381
        %v384 = vsel %vm382, %v377, %v379
        %v385 = vsel %vm382, %v381, %v377
        %v389 = vrot.slane %v384, 4
        %v390 = vrot.slane %v383, 4
        %v391 = vrot.slane %v385, 4
        %395 = vst [vmem:[#allocation2 + $0x30] sm:$0xf0] %v389
        %396 = vst [vmem:[#allocation2 + $0x38] sm:$0xf0] %v390
        %397 = vst [vmem:[#allocation2 + $0x40] sm:$0xf0] %v391
        %398 = vrot.lane.b32.xlu0 %v295, 111
        %v399 = vpop.permute.xlu0 %398
        %400 = vrot.lane.b32.xlu0 %v299, 111
        %v401 = vpop.permute.xlu0 %400
        %402 = vrot.lane.b32.xlu0 %v296, 111
        %v403 = vpop.permute.xlu0 %402
        %vm404 = vcmp.lt.s32.totalorder %v308, 111
        %v405 = vsel %vm404, %v401, %v403
        %v406 = vsel %vm404, %v399, %v401
        %v407 = vsel %vm404, %v403, %v399
        %408 = vst [vmem:[#allocation2 + $0x48] sm:$0xf] %v406
        %409 = vst [vmem:[#allocation2 + $0x50] sm:$0xf] %v405
        %410 = vst [vmem:[#allocation2 + $0x58] sm:$0xf] %v407
        %411 = vrot.lane.b32.xlu0 %v295, 110
        %v412 = vpop.permute.xlu0 %411
        %413 = vrot.lane.b32.xlu0 %v299, 110
        %v414 = vpop.permute.xlu0 %413
        %415 = vrot.lane.b32.xlu0 %v296, 110
        %v416 = vpop.permute.xlu0 %415
        %vm417 = vcmp.lt.s32.totalorder %v308, 110
        %v418 = vsel %vm417, %v414, %v416
        %v419 = vsel %vm417, %v412, %v414
        %v420 = vsel %vm417, %v416, %v412
        %v424 = vrot.slane %v419, 4
        %v425 = vrot.slane %v418, 4
        %v426 = vrot.slane %v420, 4
        %430 = vst [vmem:[#allocation2 + $0x48] sm:$0xf0] %v424
        %431 = vst [vmem:[#allocation2 + $0x50] sm:$0xf0] %v425
        %432 = vst [vmem:[#allocation2 + $0x58] sm:$0xf0] %v426
        %433 = vrot.lane.b32.xlu0 %v295, 109
        %v434 = vpop.permute.xlu0 %433
        %435 = vrot.lane.b32.xlu0 %v299, 109
        %v436 = vpop.permute.xlu0 %435
        %437 = vrot.lane.b32.xlu0 %v296, 109
        %v438 = vpop.permute.xlu0 %437
        %vm439 = vcmp.lt.s32.totalorder %v308, 109
        %v440 = vsel %vm439, %v436, %v438
        %v441 = vsel %vm439, %v434, %v436
        %v442 = vsel %vm439, %v438, %v434
        %443 = vst [vmem:[#allocation2 + $0x60] sm:$0xf] %v441
        %444 = vst [vmem:[#allocation2 + $0x68] sm:$0xf] %v440
        %445 = vst [vmem:[#allocation2 + $0x70] sm:$0xf] %v442
        %v446 = vld [vmem:[%s1] sm:$0xf]
        %v447 = vld [vmem:[%s1 + $0x4] sm:$0xf]
        %v448 = vld [vmem:[%s1 + $0x8] sm:$0xf]
        %v449 = vld [vmem:[%s1 + $0xc] sm:$0xf]
        %v450 = vld [vmem:[#allocation2] sm:$0xff]
        %v451 = vld [vmem:[#allocation2 + $0x8] sm:$0xff]
        %v452 = vld [vmem:[#allocation2 + $0x10] sm:$0xff]
        %v453 = vld [vmem:[#allocation2 + $0x18] sm:$0xff]
        %v454 = vld [vmem:[#allocation2 + $0x20] sm:$0xff]
        %v455 = vld [vmem:[#allocation2 + $0x28] sm:$0xff]
        %v456 = vld [vmem:[#allocation2 + $0x30] sm:$0xff]
        %v457 = vld [vmem:[#allocation2 + $0x38] sm:$0xff]
        %v458 = vld [vmem:[#allocation2 + $0x40] sm:$0xff]
        %v459 = vld [vmem:[#allocation2 + $0x48] sm:$0xff]
        %v460 = vld [vmem:[#allocation2 + $0x50] sm:$0xff]
        %v461 = vld [vmem:[#allocation2 + $0x58] sm:$0xff]
        %v462 = vld [vmem:[#allocation2 + $0x60] sm:$0xf]
        %v463 = vld [vmem:[#allocation2 + $0x68] sm:$0xf]
        %v464 = vld [vmem:[#allocation2 + $0x70] sm:$0xf]
        %v465 = vpack.c.bf16 %v453, %v450
        %v466 = vpack.c.bf16 %v454, %v451
        %v467 = vpack.c.bf16 %v455, %v452
        %v468 = vpack.c.bf16 %v459, %v456
        %v469 = vpack.c.bf16 %v460, %v457
        %v470 = vpack.c.bf16 %v461, %v458
        %v471 = vpack.c.bf16 %v462, %v462
        %v472 = vpack.c.bf16 %v463, %v463
        %v473 = vpack.c.bf16 %v464, %v464
        %v474 = vld [vmem:[%s2] sm:$0xff]
        %v475 = vld [vmem:[%s2 + $0x8] sm:$0xff]
        %v476 = vld [vmem:[%s2 + $0x10] sm:$0xff]
        %v477 = vld [vmem:[%s2 + $0x18] sm:$0xff]
        %479 = vset.pattern.permute.xlu0 0
        %480 = vperm.xlu0 %479, %v474
        %v481 = vpop.permute.xlu0 %480
        %484 = vset.pattern.permute.xlu0 0
        %485 = vperm.xlu0 %484, %v475
        %v486 = vpop.permute.xlu0 %485
        %489 = vset.pattern.permute.xlu0 0
        %490 = vperm.xlu0 %489, %v476
        %v491 = vpop.permute.xlu0 %490
        %494 = vset.pattern.permute.xlu0 0
        %495 = vperm.xlu0 %494, %v477
        %v496 = vpop.permute.xlu0 %495
        %v502 = vunpack.c.l.b16 %v446
        %v503 = vunpack.c.l.b16 %v447
        %v504 = vunpack.c.l.b16 %v448
        %v505 = vunpack.c.l.b16 %v449
        %v506 = vpack.c.b16 %v503, %v502
        %v507 = vpack.c.b16 %v505, %v504
        %vm508 = vcmask 293888
        %v510 = vsel %vm508, %v506, 0
        %v513 = vsel %vm508, %v507, 0
        %vm515 = vcmask 1041408
        %v517 = vsel %vm515, %v471, 0
        %v520 = vsel %vm515, %v472, 0
        %v523 = vsel %vm515, %v473, 0
        %525 = vmatprep.subr.bf16.mxu0 %v466
        %526 = vmatpush1.bf16.msra.mxu0 %v465
        %527 = vmatprep.subr.bf16.mxu0 %v469
        %528 = vmatpush1.bf16.msra.mxu0 %v468
        %529 = vmatprep.subr.bf16.mxu0 %v520
        %530 = vmatpush1.bf16.msra.mxu0 %v517
        %531 = vmatprep.subr.bf16.mxu0 0
        %532 = vmatpush1.bf16.msra.mxu0 0
        %533 = vmatprep.subr.bf16.mxu0 0
        %534 = vmatpush1.bf16.msra.mxu0 0
        %535 = vmatprep.subr.bf16.mxu0 0
        %536 = vmatpush1.bf16.msra.mxu0 0
        %537 = vmatprep.subr.bf16.mxu0 0
        %538 = vmatpush1.bf16.msra.mxu0 0
        %539 = vmatprep.subr.bf16.mxu0 0
        %540 = vmatpush1.bf16.msra.mxu0 0
        %541 = vmatprep.subr.bf16.mxu0 0
        %542 = vmatpush1.bf16.msra.mxu0 0
        %543 = vmatprep.subr.bf16.mxu0 0
        %544 = vmatpush1.bf16.msra.mxu0 0
        %545 = vmatprep.subr.bf16.mxu0 0
        %546 = vmatpush1.bf16.msra.mxu0 0
        %547 = vmatprep.subr.bf16.mxu0 0
        %548 = vmatpush1.bf16.msra.mxu0 0
        %549 = vmatprep.subr.bf16.mxu0 0
        %550 = vmatpush1.bf16.msra.mxu0 0
        %551 = vmatprep.subr.bf16.mxu0 0
        %552 = vmatpush1.bf16.msra.mxu0 0
        %553 = vmatprep.subr.bf16.mxu0 0
        %554 = vmatpush1.bf16.msra.mxu0 0
        %555 = vmatprep.subr.bf16.mxu0 0
        %556 = vmatpush1.bf16.msra.mxu0 0
        %557 = vmatprep.mubr.bf16.mxu0 0
        %558 = vmatmul.mubr.bf16.gmra.mrb[0].mxu0 %v510
        %v559 = vpop.f32.mrb[0].mxu0
        %v560 = vadd.f32 %v481, %v559
        %v561 = vpop.f32.mrb[0].mxu0
        %v562 = vadd.f32 %v481, %v561
        %v563 = vpop.f32.mrb[0].mxu0
        %v564 = vadd.f32 %v486, %v563
        %v565 = vpop.f32.mrb[0].mxu0
        %v566 = vadd.f32 %v486, %v565
        %567 = vmatprep.mubr.bf16.mxu0 0
        %568 = vmatmul.mubr.bf16.gmra.mrb[0].mxu0 %v513
        %v569 = vpop.f32.mrb[0].mxu0
        %v570 = vadd.f32 %v491, %v569
        %v571 = vpop.f32.mrb[0].mxu0
        %v572 = vadd.f32 %v491, %v571
        %v573 = vpop.f32.mrb[0].mxu0
        %v574 = vadd.f32 %v496, %v573
        %v575 = vpop.f32.mrb[0].mxu0
        %v576 = vadd.f32 %v496, %v575
        %577 = vdwg.mxu0
        %578 = vmatprep.subr.bf16.mxu0 0
        %579 = vmatpush1.bf16.msra.mxu0 %v467
        %580 = vmatprep.subr.bf16.mxu0 0
        %581 = vmatpush1.bf16.msra.mxu0 %v470
        %582 = vmatprep.subr.bf16.mxu0 0
        %583 = vmatpush1.bf16.msra.mxu0 %v523
        %584 = vmatprep.subr.bf16.mxu0 0
        %585 = vmatpush1.bf16.msra.mxu0 0
        %586 = vmatprep.subr.bf16.mxu0 0
        %587 = vmatpush1.bf16.msra.mxu0 0
        %588 = vmatprep.subr.bf16.mxu0 0
        %589 = vmatpush1.bf16.msra.mxu0 0
        %590 = vmatprep.subr.bf16.mxu0 0
        %591 = vmatpush1.bf16.msra.mxu0 0
        %592 = vmatprep.subr.bf16.mxu0 0
        %593 = vmatpush1.bf16.msra.mxu0 0
        %594 = vmatprep.subr.bf16.mxu0 0
        %595 = vmatpush1.bf16.msra.mxu0 0
        %596 = vmatprep.subr.bf16.mxu0 0
        %597 = vmatpush1.bf16.msra.mxu0 0
        %598 = vmatprep.subr.bf16.mxu0 0
        %599 = vmatpush1.bf16.msra.mxu0 0
        %600 = vmatprep.subr.bf16.mxu0 0
        %601 = vmatpush1.bf16.msra.mxu0 0
        %602 = vmatprep.subr.bf16.mxu0 0
        %603 = vmatpush1.bf16.msra.mxu0 0
        %604 = vmatprep.subr.bf16.mxu0 0
        %605 = vmatpush1.bf16.msra.mxu0 0
        %606 = vmatprep.subr.bf16.mxu0 0
        %607 = vmatpush1.bf16.msra.mxu0 0
        %608 = vmatprep.subr.bf16.mxu0 0
        %609 = vmatpush1.bf16.msra.mxu0 0
        %610 = vmatprep.mubr.bf16.mxu0 0
        %611 = vmatmul.mubr.bf16.gmra.mrb[0].mxu0 %v510
        %v612 = vpop.f32.mrb[0].mxu0
        %v613 = vadd.f32 %v481, %v612
        %v614 = vpop.f32.mrb[0].mxu0
        %v615 = vpop.f32.mrb[0].mxu0
        %v616 = vadd.f32 %v486, %v615
        %v617 = vpop.f32.mrb[0].mxu0
        %618 = vmatprep.mubr.bf16.mxu0 0
        %619 = vmatmul.mubr.bf16.gmra.mrb[0].mxu0 %v513
        %v620 = vpop.f32.mrb[0].mxu0
        %v621 = vadd.f32 %v491, %v620
        %v622 = vpop.f32.mrb[0].mxu0
        %v623 = vpop.f32.mrb[0].mxu0
        %v624 = vadd.f32 %v496, %v623
        %v625 = vpop.f32.mrb[0].mxu0
        %626 = vdwg.mxu0
        %vm627 = vcmp.ge.f32.partialorder %v560, 0.0
        %vm628 = vcmp.ge.f32.partialorder %v562, 0.0
        %vm629 = vcmp.ge.f32.partialorder %v613, 0.0
        %vm630 = vcmp.ge.f32.partialorder %v564, 0.0
        %vm631 = vcmp.ge.f32.partialorder %v566, 0.0
        %vm632 = vcmp.ge.f32.partialorder %v616, 0.0
        %vm633 = vcmp.ge.f32.partialorder %v570, 0.0
        %vm634 = vcmp.ge.f32.partialorder %v572, 0.0
        %vm635 = vcmp.ge.f32.partialorder %v621, 0.0
        %vm636 = vcmp.ge.f32.partialorder %v574, 0.0
        %vm637 = vcmp.ge.f32.partialorder %v576, 0.0
        %vm638 = vcmp.ge.f32.partialorder %v624, 0.0
        %v639 = vstv %s297
        %v640 = vmul.f32 %v639, %v560
        %v641 = vmul.f32 %v639, %v562
        %v642 = vmul.f32 %v639, %v613
        %v643 = vmul.f32 %v639, %v564
        %v644 = vmul.f32 %v639, %v566
        %v645 = vmul.f32 %v639, %v616
        %v646 = vmul.f32 %v639, %v570
        %v647 = vmul.f32 %v639, %v572
        %v648 = vmul.f32 %v639, %v621
        %v649 = vmul.f32 %v639, %v574
        %v650 = vmul.f32 %v639, %v576
        %v651 = vmul.f32 %v639, %v624
        %v652 = vsel %vm627, %v560, %v640
        %v653 = vsel %vm628, %v562, %v641
        %v654 = vsel %vm629, %v613, %v642
        %v655 = vsel %vm630, %v564, %v643
        %v656 = vsel %vm631, %v566, %v644
        %v657 = vsel %vm632, %v616, %v645
        %v658 = vsel %vm633, %v570, %v646
        %v659 = vsel %vm634, %v572, %v647
        %v660 = vsel %vm635, %v621, %v648
        %v661 = vsel %vm636, %v574, %v649
        %v662 = vsel %vm637, %v576, %v650
        %v663 = vsel %vm638, %v624, %v651
        %v665 = vlaneseq
        %v666 = vshrl.u32 %v665, 7
        %v667 = vsub.s32 0, %v666
        %v668 = vrot.slane %v294, %v667
        %v669 = vlaneseq
        %v670 = vshrl.u32 %v669, 7
        %v671 = vsub.s32 1, %v670
        %v672 = vrot.slane %v294, %v671
        %v673 = vlaneseq
        %v674 = vshrl.u32 %v673, 7
        %v675 = vsub.s32 2, %v674
        %v676 = vrot.slane %v294, %v675
        %v680 = vmul.f32 %v652, %v668
        %v681 = vmul.f32 %v653, %v672
        %v682 = vmul.f32 %v654, %v676
        %v683 = vmul.f32 %v655, %v668
        %v684 = vmul.f32 %v656, %v672
        %v685 = vmul.f32 %v657, %v676
        %v686 = vmul.f32 %v658, %v668
        %v687 = vmul.f32 %v659, %v672
        %v688 = vmul.f32 %v660, %v676
        %v689 = vmul.f32 %v661, %v668
        %v690 = vmul.f32 %v662, %v672
        %v691 = vmul.f32 %v663, %v676
        %s692 = sld [smem:[#allocation4 + $0x2]]
        %693 = vmatprep.subr.mxu0 %v681
        %694 = vmatpush1.xpose.msra.mxu0 %v680
        %695 = vmatprep.subr.mxu0 %v684
        %696 = vmatpush1.xpose.msra.mxu0 %v683
        %697 = vmatprep.subr.mxu0 %v687
        %698 = vmatpush1.xpose.msra.mxu0 %v686
        %699 = vmatprep.subr.mxu0 %v690
        %700 = vmatpush1.xpose.msra.mxu0 %v689
        %701 = vmatprep.subr.mxu0 0.0
        %702 = vmatpush1.xpose.msra.mxu0 0.0
        %703 = vmatprep.subr.mxu0 0.0
        %704 = vmatpush1.xpose.msra.mxu0 0.0
        %705 = vmatprep.subr.mxu0 0.0
        %706 = vmatpush1.xpose.msra.mxu0 0.0
        %707 = vmatprep.subr.mxu0 0.0
        %708 = vmatpush1.xpose.msra.mxu0 0.0
        %709 = vmatprep.subr.mxu0 0.0
        %710 = vmatpush1.xpose.msra.mxu0 0.0
        %711 = vmatprep.subr.mxu0 0.0
        %712 = vmatpush1.xpose.msra.mxu0 0.0
        %713 = vmatprep.subr.mxu0 0.0
        %714 = vmatpush1.xpose.msra.mxu0 0.0
        %715 = vmatprep.subr.mxu0 0.0
        %716 = vmatpush1.xpose.msra.mxu0 0.0
        %717 = vmatprep.subr.mxu0 0.0
        %718 = vmatpush1.xpose.msra.mxu0 0.0
        %719 = vmatprep.subr.mxu0 0.0
        %720 = vmatpush1.xpose.msra.mxu0 0.0
        %721 = vmatprep.subr.mxu0 0.0
        %722 = vmatpush1.xpose.msra.mxu0 0.0
        %723 = vmatprep.subr.mxu0 0.0
        %724 = vmatpush1.xpose.msra.mxu0 0.0
        %725 = vmatprep.subr.mxu0 0.0
        %726 = vmatpush1.xpose.msra.mxu0 0.0
        %727 = vmatprep.subr.mxu0 0.0
        %728 = vmatpush1.xpose.msra.mxu0 0.0
        %729 = vmatprep.subr.mxu0 0.0
        %730 = vmatpush1.xpose.msra.mxu0 0.0
        %731 = vmatprep.subr.mxu0 0.0
        %732 = vmatpush1.xpose.msra.mxu0 0.0
        %733 = vmatprep.subr.mxu0 0.0
        %734 = vmatpush1.xpose.msra.mxu0 0.0
        %735 = vmatprep.subr.mxu0 0.0
        %736 = vmatpush1.xpose.msra.mxu0 0.0
        %737 = vmatprep.subr.mxu0 0.0
        %738 = vmatpush1.xpose.msra.mxu0 0.0
        %739 = vmatprep.subr.mxu0 0.0
        %740 = vmatpush1.xpose.msra.mxu0 0.0
        %741 = vmatprep.subr.mxu0 0.0
        %742 = vmatpush1.xpose.msra.mxu0 0.0
        %743 = vmatprep.subr.mxu0 0.0
        %744 = vmatpush1.xpose.msra.mxu0 0.0
        %745 = vmatprep.subr.mxu0 0.0
        %746 = vmatpush1.xpose.msra.mxu0 0.0
        %747 = vmatprep.subr.mxu0 0.0
        %748 = vmatpush1.xpose.msra.mxu0 0.0
        %749 = vmatprep.subr.mxu0 0.0
        %750 = vmatpush1.xpose.msra.mxu0 0.0
        %751 = vmatprep.subr.mxu0 0.0
        %752 = vmatpush1.xpose.msra.mxu0 0.0
        %753 = vmatprep.subr.mxu0 0.0
        %754 = vmatpush1.xpose.msra.mxu0 0.0
        %755 = vmatprep.subr.mxu0 0.0
        %756 = vmatpush1.xpose.msra.mxu0 0.0
        %757 = vmatprep.mubr.f32.mxu0 %v681
        %758 = vmatmul.mubr.f32.gmra.mrb[0].mxu0 %v680
        %v759 = vpop.f32.mrb[0].mxu0
        %v760 = vadd.f32 0.0, %v759
        %v761 = vpop.f32.mrb[0].mxu0
        %762 = vmatprep.mubr.f32.mxu0 %v684
        %763 = vmatmul.mubr.f32.gmra.mrb[0].mxu0 %v683
        %v764 = vpop.f32.mrb[0].mxu0
        %v765 = vadd.f32 0.0, %v764
        %v766 = vpop.f32.mrb[0].mxu0
        %767 = vmatprep.mubr.f32.mxu0 %v687
        %768 = vmatmul.mubr.f32.gmra.mrb[0].mxu0 %v686
        %v769 = vpop.f32.mrb[0].mxu0
        %v770 = vadd.f32 0.0, %v769
        %v771 = vpop.f32.mrb[0].mxu0
        %772 = vmatprep.mubr.f32.mxu0 %v690
        %773 = vmatmul.mubr.f32.gmra.mrb[0].mxu0 %v689
        %v774 = vpop.f32.mrb[0].mxu0
        %v775 = vadd.f32 0.0, %v774
        %v776 = vpop.f32.mrb[0].mxu0
        %777 = vdwg.mxu0
        %778 = vmatprep.subr.mxu0 0.0
        %779 = vmatpush1.xpose.msra.mxu0 %v682
        %780 = vmatprep.subr.mxu0 0.0
        %781 = vmatpush1.xpose.msra.mxu0 %v685
        %782 = vmatprep.subr.mxu0 0.0
        %783 = vmatpush1.xpose.msra.mxu0 %v688
        %784 = vmatprep.subr.mxu0 0.0
        %785 = vmatpush1.xpose.msra.mxu0 %v691
        %786 = vmatprep.subr.mxu0 0.0
        %787 = vmatpush1.xpose.msra.mxu0 0.0
        %788 = vmatprep.subr.mxu0 0.0
        %789 = vmatpush1.xpose.msra.mxu0 0.0
        %790 = vmatprep.subr.mxu0 0.0
        %791 = vmatpush1.xpose.msra.mxu0 0.0
        %792 = vmatprep.subr.mxu0 0.0
        %793 = vmatpush1.xpose.msra.mxu0 0.0
        %794 = vmatprep.subr.mxu0 0.0
        %795 = vmatpush1.xpose.msra.mxu0 0.0
        %796 = vmatprep.subr.mxu0 0.0
        %797 = vmatpush1.xpose.msra.mxu0 0.0
        %798 = vmatprep.subr.mxu0 0.0
        %799 = vmatpush1.xpose.msra.mxu0 0.0
        %800 = vmatprep.subr.mxu0 0.0
        %801 = vmatpush1.xpose.msra.mxu0 0.0
        %802 = vmatprep.subr.mxu0 0.0
        %803 = vmatpush1.xpose.msra.mxu0 0.0
        %804 = vmatprep.subr.mxu0 0.0
        %805 = vmatpush1.xpose.msra.mxu0 0.0
        %806 = vmatprep.subr.mxu0 0.0
        %807 = vmatpush1.xpose.msra.mxu0 0.0
        %808 = vmatprep.subr.mxu0 0.0
        %809 = vmatpush1.xpose.msra.mxu0 0.0
        %810 = vmatprep.subr.mxu0 0.0
        %811 = vmatpush1.xpose.msra.mxu0 0.0
        %812 = vmatprep.subr.mxu0 0.0
        %813 = vmatpush1.xpose.msra.mxu0 0.0
        %814 = vmatprep.subr.mxu0 0.0
        %815 = vmatpush1.xpose.msra.mxu0 0.0
        %816 = vmatprep.subr.mxu0 0.0
        %817 = vmatpush1.xpose.msra.mxu0 0.0
        %818 = vmatprep.subr.mxu0 0.0
        %819 = vmatpush1.xpose.msra.mxu0 0.0
        %820 = vmatprep.subr.mxu0 0.0
        %821 = vmatpush1.xpose.msra.mxu0 0.0
        %822 = vmatprep.subr.mxu0 0.0
        %823 = vmatpush1.xpose.msra.mxu0 0.0
        %824 = vmatprep.subr.mxu0 0.0
        %825 = vmatpush1.xpose.msra.mxu0 0.0
        %826 = vmatprep.subr.mxu0 0.0
        %827 = vmatpush1.xpose.msra.mxu0 0.0
        %828 = vmatprep.subr.mxu0 0.0
        %829 = vmatpush1.xpose.msra.mxu0 0.0
        %830 = vmatprep.subr.mxu0 0.0
        %831 = vmatpush1.xpose.msra.mxu0 0.0
        %832 = vmatprep.subr.mxu0 0.0
        %833 = vmatpush1.xpose.msra.mxu0 0.0
        %834 = vmatprep.subr.mxu0 0.0
        %835 = vmatpush1.xpose.msra.mxu0 0.0
        %836 = vmatprep.subr.mxu0 0.0
        %837 = vmatpush1.xpose.msra.mxu0 0.0
        %838 = vmatprep.subr.mxu0 0.0
        %839 = vmatpush1.xpose.msra.mxu0 0.0
        %840 = vmatprep.subr.mxu0 0.0
        %841 = vmatpush1.xpose.msra.mxu0 0.0
        %842 = vmatprep.mubr.f32.mxu0 0.0
        %843 = vmatmul.mubr.f32.gmra.mrb[0].mxu0 %v682
        %v844 = vpop.f32.mrb[0].mxu0
        %v845 = vadd.f32 %v760, %v844
        %v846 = vpop.f32.mrb[0].mxu0
        %847 = vmatprep.mubr.f32.mxu0 0.0
        %848 = vmatmul.mubr.f32.gmra.mrb[0].mxu0 %v685
        %v849 = vpop.f32.mrb[0].mxu0
        %v850 = vadd.f32 %v765, %v849
        %v851 = vpop.f32.mrb[0].mxu0
        %852 = vmatprep.mubr.f32.mxu0 0.0
        %853 = vmatmul.mubr.f32.gmra.mrb[0].mxu0 %v688
        %v854 = vpop.f32.mrb[0].mxu0
        %v855 = vadd.f32 %v770, %v854
        %v856 = vpop.f32.mrb[0].mxu0
        %857 = vmatprep.mubr.f32.mxu0 0.0
        %858 = vmatmul.mubr.f32.gmra.mrb[0].mxu0 %v691
        %v859 = vpop.f32.mrb[0].mxu0
        %v860 = vadd.f32 %v775, %v859
        %v861 = vpop.f32.mrb[0].mxu0
        %862 = vdwg.mxu0
        %v863 = vmul.f32 %v845, 0.0625
        %v864 = vmul.f32 %v850, 0.0625
        %v865 = vmul.f32 %v855, 0.0625
        %v866 = vmul.f32 %v860, 0.0625
        %vm867 = vcmask 261120
        %v868 = vsel %vm867, %v863, -inf
        %869 = vmax.xlane.f32.xlu0 %v868
        %v870 = vpop.xlane.xlu0 %869
        %v871 = vsel %vm867, %v864, -inf
        %872 = vmax.xlane.f32.xlu0 %v871
        %v873 = vpop.xlane.xlu0 %872
        %v874 = vsel %vm867, %v865, -inf
        %875 = vmax.xlane.f32.xlu0 %v874
        %v876 = vpop.xlane.xlu0 %875
        %v877 = vsel %vm867, %v866, -inf
        %878 = vmax.xlane.f32.xlu0 %v877
        %v879 = vpop.xlane.xlu0 %878
        %v880 = vsub.f32 %v870, %v863
        %v881 = vsub.f32 %v873, %v864
        %v882 = vsub.f32 %v876, %v865
        %v883 = vsub.f32 %v879, %v866
        %v884 = vsel %vm867, %v880, -inf
        %885 = vmax.xlane.f32.xlu0 %v884
        %v886 = vpop.xlane.xlu0 %885
        %v887 = vsel %vm867, %v881, -inf
        %888 = vmax.xlane.f32.xlu0 %v887
        %v889 = vpop.xlane.xlu0 %888
        %v890 = vsel %vm867, %v882, -inf
        %891 = vmax.xlane.f32.xlu0 %v890
        %v892 = vpop.xlane.xlu0 %891
        %v893 = vsel %vm867, %v883, -inf
        %894 = vmax.xlane.f32.xlu0 %v893
        %v895 = vpop.xlane.xlu0 %894
        %v896 = vsub.f32 %v880, %v886
        %v897 = vsub.f32 %v881, %v889
        %v898 = vsub.f32 %v882, %v892
        %v899 = vsub.f32 %v883, %v895
        %v900 = vmul.f32 %v896, 1.442695
        %v901 = vpow.pop %v900
        %v902 = vmul.f32 %v897, 1.442695
        %v903 = vpow.pop %v902
        %v904 = vmul.f32 %v898, 1.442695
        %v905 = vpow.pop %v904
        %v906 = vmul.f32 %v899, 1.442695
        %v907 = vpow.pop %v906
        %v908 = vsel %vm867, %v901, 0.0
        %909 = vadd.xlane.f32.xlu0 %v908
        %v910 = vpop.xlane.xlu0 %909
        %v911 = vsel %vm867, %v903, 0.0
        %912 = vadd.xlane.f32.xlu0 %v911
        %v913 = vpop.xlane.xlu0 %912
        %v914 = vsel %vm867, %v905, 0.0
        %915 = vadd.xlane.f32.xlu0 %v914
        %v916 = vpop.xlane.xlu0 %915
        %v917 = vsel %vm867, %v907, 0.0
        %918 = vadd.xlane.f32.xlu0 %v917
        %v919 = vpop.xlane.xlu0 %918
        %v920 = vrcp.pop %v910
        %v921 = vmul.f32 %v901, %v920
        %v922 = vrcp.pop %v913
        %v923 = vmul.f32 %v903, %v922
        %v924 = vrcp.pop %v916
        %v925 = vmul.f32 %v905, %v924
        %v926 = vrcp.pop %v919
        %v927 = vmul.f32 %v907, %v926
        %v929 = vsel %vm867, %v921, 0
        %v932 = vsel %vm867, %v923, 0
        %v935 = vsel %vm867, %v925, 0
        %v938 = vsel %vm867, %v927, 0
        %940 = vmatprep.subr.mxu0 %v681
        %941 = vmatpush1.msra.mxu0 %v680
        %942 = vmatprep.subr.mxu0 %v684
        %943 = vmatpush1.msra.mxu0 %v683
        %944 = vmatprep.subr.mxu0 %v687
        %945 = vmatpush1.msra.mxu0 %v686
        %946 = vmatprep.subr.mxu0 %v690
        %947 = vmatpush1.msra.mxu0 %v689
        %948 = vmatprep.subr.mxu0 0.0
        %949 = vmatpush1.msra.mxu0 0.0
        %950 = vmatprep.subr.mxu0 0.0
        %951 = vmatpush1.msra.mxu0 0.0
        %952 = vmatprep.subr.mxu0 0.0
        %953 = vmatpush1.msra.mxu0 0.0
        %954 = vmatprep.subr.mxu0 0.0
        %955 = vmatpush1.msra.mxu0 0.0
        %956 = vmatprep.subr.mxu0 0.0
        %957 = vmatpush1.msra.mxu0 0.0
        %958 = vmatprep.subr.mxu0 0.0
        %959 = vmatpush1.msra.mxu0 0.0
        %960 = vmatprep.subr.mxu0 0.0
        %961 = vmatpush1.msra.mxu0 0.0
        %962 = vmatprep.subr.mxu0 0.0
        %963 = vmatpush1.msra.mxu0 0.0
        %964 = vmatprep.subr.mxu0 0.0
        %965 = vmatpush1.msra.mxu0 0.0
        %966 = vmatprep.subr.mxu0 0.0
        %967 = vmatpush1.msra.mxu0 0.0
        %968 = vmatprep.subr.mxu0 0.0
        %969 = vmatpush1.msra.mxu0 0.0
        %970 = vmatprep.subr.mxu0 0.0
        %971 = vmatpush1.msra.mxu0 0.0
        %972 = vmatprep.subr.mxu0 0.0
        %973 = vmatpush1.msra.mxu0 0.0
        %974 = vmatprep.subr.mxu0 0.0
        %975 = vmatpush1.msra.mxu0 0.0
        %976 = vmatprep.subr.mxu0 0.0
        %977 = vmatpush1.msra.mxu0 0.0
        %978 = vmatprep.subr.mxu0 0.0
        %979 = vmatpush1.msra.mxu0 0.0
        %980 = vmatprep.subr.mxu0 0.0
        %981 = vmatpush1.msra.mxu0 0.0
        %982 = vmatprep.subr.mxu0 0.0
        %983 = vmatpush1.msra.mxu0 0.0
        %984 = vmatprep.subr.mxu0 0.0
        %985 = vmatpush1.msra.mxu0 0.0
        %986 = vmatprep.subr.mxu0 0.0
        %987 = vmatpush1.msra.mxu0 0.0
        %988 = vmatprep.subr.mxu0 0.0
        %989 = vmatpush1.msra.mxu0 0.0
        %990 = vmatprep.subr.mxu0 0.0
        %991 = vmatpush1.msra.mxu0 0.0
        %992 = vmatprep.subr.mxu0 0.0
        %993 = vmatpush1.msra.mxu0 0.0
        %994 = vmatprep.subr.mxu0 0.0
        %995 = vmatpush1.msra.mxu0 0.0
        %996 = vmatprep.subr.mxu0 0.0
        %997 = vmatpush1.msra.mxu0 0.0
        %998 = vmatprep.subr.mxu0 0.0
        %999 = vmatpush1.msra.mxu0 0.0
        %1000 = vmatprep.subr.mxu0 0.0
        %1001 = vmatpush1.msra.mxu0 0.0
        %1002 = vmatprep.subr.mxu0 0.0
        %1003 = vmatpush1.msra.mxu0 0.0
        %1004 = vmatprep.mubr.f32.mxu0 0.0
        %1005 = vmatmul.mubr.f32.gmra.mrb[0].mxu0 %v929
        %v1006 = vpop.f32.mrb[0].mxu0
        %v1007 = vadd.f32 0.0, %v1006
        %v1008 = vpop.f32.mrb[0].mxu0
        %v1009 = vadd.f32 0.0, %v1008
        %1010 = vmatprep.mubr.f32.mxu0 0.0
        %1011 = vmatmul.mubr.f32.gmra.mrb[0].mxu0 %v932
        %v1012 = vpop.f32.mrb[0].mxu0
        %v1013 = vadd.f32 0.0, %v1012
        %v1014 = vpop.f32.mrb[0].mxu0
        %v1015 = vadd.f32 0.0, %v1014
        %1016 = vmatprep.mubr.f32.mxu0 0.0
        %1017 = vmatmul.mubr.f32.gmra.mrb[0].mxu0 %v935
        %v1018 = vpop.f32.mrb[0].mxu0
        %v1019 = vadd.f32 0.0, %v1018
        %v1020 = vpop.f32.mrb[0].mxu0
        %v1021 = vadd.f32 0.0, %v1020
        %1022 = vmatprep.mubr.f32.mxu0 0.0
        %1023 = vmatmul.mubr.f32.gmra.mrb[0].mxu0 %v938
        %v1024 = vpop.f32.mrb[0].mxu0
        %v1025 = vadd.f32 0.0, %v1024
        %v1026 = vpop.f32.mrb[0].mxu0
        %v1027 = vadd.f32 0.0, %v1026
        %1028 = vdwg.mxu0
        %1029 = vmatprep.subr.mxu0 0.0
        %1030 = vmatpush1.msra.mxu0 %v682
        %1031 = vmatprep.subr.mxu0 0.0
        %1032 = vmatpush1.msra.mxu0 %v685
        %1033 = vmatprep.subr.mxu0 0.0
        %1034 = vmatpush1.msra.mxu0 %v688
        %1035 = vmatprep.subr.mxu0 0.0
        %1036 = vmatpush1.msra.mxu0 %v691
        %1037 = vmatprep.subr.mxu0 0.0
        %1038 = vmatpush1.msra.mxu0 0.0
        %1039 = vmatprep.subr.mxu0 0.0
        %1040 = vmatpush1.msra.mxu0 0.0
        %1041 = vmatprep.subr.mxu0 0.0
        %1042 = vmatpush1.msra.mxu0 0.0
        %1043 = vmatprep.subr.mxu0 0.0
        %1044 = vmatpush1.msra.mxu0 0.0
        %1045 = vmatprep.subr.mxu0 0.0
        %1046 = vmatpush1.msra.mxu0 0.0
        %1047 = vmatprep.subr.mxu0 0.0
        %1048 = vmatpush1.msra.mxu0 0.0
        %1049 = vmatprep.subr.mxu0 0.0
        %1050 = vmatpush1.msra.mxu0 0.0
        %1051 = vmatprep.subr.mxu0 0.0
        %1052 = vmatpush1.msra.mxu0 0.0
        %1053 = vmatprep.subr.mxu0 0.0
        %1054 = vmatpush1.msra.mxu0 0.0
        %1055 = vmatprep.subr.mxu0 0.0
        %1056 = vmatpush1.msra.mxu0 0.0
        %1057 = vmatprep.subr.mxu0 0.0
        %1058 = vmatpush1.msra.mxu0 0.0
        %1059 = vmatprep.subr.mxu0 0.0
        %1060 = vmatpush1.msra.mxu0 0.0
        %1061 = vmatprep.subr.mxu0 0.0
        %1062 = vmatpush1.msra.mxu0 0.0
        %1063 = vmatprep.subr.mxu0 0.0
        %1064 = vmatpush1.msra.mxu0 0.0
        %1065 = vmatprep.subr.mxu0 0.0
        %1066 = vmatpush1.msra.mxu0 0.0
        %1067 = vmatprep.subr.mxu0 0.0
        %1068 = vmatpush1.msra.mxu0 0.0
        %1069 = vmatprep.subr.mxu0 0.0
        %1070 = vmatpush1.msra.mxu0 0.0
        %1071 = vmatprep.subr.mxu0 0.0
        %1072 = vmatpush1.msra.mxu0 0.0
        %1073 = vmatprep.subr.mxu0 0.0
        %1074 = vmatpush1.msra.mxu0 0.0
        %1075 = vmatprep.subr.mxu0 0.0
        %1076 = vmatpush1.msra.mxu0 0.0
        %1077 = vmatprep.subr.mxu0 0.0
        %1078 = vmatpush1.msra.mxu0 0.0
        %1079 = vmatprep.subr.mxu0 0.0
        %1080 = vmatpush1.msra.mxu0 0.0
        %1081 = vmatprep.subr.mxu0 0.0
        %1082 = vmatpush1.msra.mxu0 0.0
        %1083 = vmatprep.subr.mxu0 0.0
        %1084 = vmatpush1.msra.mxu0 0.0
        %1085 = vmatprep.subr.mxu0 0.0
        %1086 = vmatpush1.msra.mxu0 0.0
        %1087 = vmatprep.subr.mxu0 0.0
        %1088 = vmatpush1.msra.mxu0 0.0
        %1089 = vmatprep.subr.mxu0 0.0
        %1090 = vmatpush1.msra.mxu0 0.0
        %1091 = vmatprep.subr.mxu0 0.0
        %1092 = vmatpush1.msra.mxu0 0.0
        %1093 = vmatprep.mubr.f32.mxu0 0.0
        %1094 = vmatmul.mubr.f32.gmra.mrb[0].mxu0 %v929
        %v1095 = vpop.f32.mrb[0].mxu0
        %v1096 = vadd.f32 0.0, %v1095
        %v1097 = vpop.f32.mrb[0].mxu0
        %1098 = vmatprep.mubr.f32.mxu0 0.0
        %1099 = vmatmul.mubr.f32.gmra.mrb[0].mxu0 %v932
        %v1100 = vpop.f32.mrb[0].mxu0
        %v1101 = vadd.f32 0.0, %v1100
        %v1102 = vpop.f32.mrb[0].mxu0
        %1103 = vmatprep.mubr.f32.mxu0 0.0
        %1104 = vmatmul.mubr.f32.gmra.mrb[0].mxu0 %v935
        %v1105 = vpop.f32.mrb[0].mxu0
        %v1106 = vadd.f32 0.0, %v1105
        %v1107 = vpop.f32.mrb[0].mxu0
        %1108 = vmatprep.mubr.f32.mxu0 0.0
        %1109 = vmatmul.mubr.f32.gmra.mrb[0].mxu0 %v938
        %v1110 = vpop.f32.mrb[0].mxu0
        %v1111 = vadd.f32 0.0, %v1110
        %v1112 = vpop.f32.mrb[0].mxu0
        %1113 = vdwg.mxu0
        %v1114 = vstv %s692
        %v1115 = vmul.f32 %v1114, %v1007
        %v1116 = vmul.f32 %v1114, %v1009
        %v1117 = vmul.f32 %v1114, %v1096
        %v1118 = vmul.f32 %v1114, %v1013
        %v1119 = vmul.f32 %v1114, %v1015
        %v1120 = vmul.f32 %v1114, %v1101
        %v1121 = vmul.f32 %v1114, %v1019
        %v1122 = vmul.f32 %v1114, %v1021
        %v1123 = vmul.f32 %v1114, %v1106
        %v1124 = vmul.f32 %v1114, %v1025
        %v1125 = vmul.f32 %v1114, %v1027
        %v1126 = vmul.f32 %v1114, %v1111
        %v1127 = vadd.f32 %v1115, %v680
        %v1128 = vadd.f32 %v1116, %v681
        %v1129 = vadd.f32 %v1117, %v682
        %v1130 = vadd.f32 %v1118, %v683
        %v1131 = vadd.f32 %v1119, %v684
        %v1132 = vadd.f32 %v1120, %v685
        %v1133 = vadd.f32 %v1121, %v686
        %v1134 = vadd.f32 %v1122, %v687
        %v1135 = vadd.f32 %v1123, %v688
        %v1136 = vadd.f32 %v1124, %v689
        %v1137 = vadd.f32 %v1125, %v690
        %v1138 = vadd.f32 %v1126, %v691
        %s1139 = sld [smem:[#allocation4 + $0x1]]
        %1140 = vrot.lane.b32.xlu0 %v1127, 19
        %v1141 = vpop.permute.xlu0 %1140
        %1142 = vrot.lane.b32.xlu0 %v1130, 19
        %v1143 = vpop.permute.xlu0 %1142
        %1144 = vrot.lane.b32.xlu0 %v1133, 19
        %v1145 = vpop.permute.xlu0 %1144
        %1146 = vrot.lane.b32.xlu0 %v1136, 19
        %v1147 = vpop.permute.xlu0 %1146
        %1148 = vrot.lane.b32.xlu0 %v1128, 19
        %v1149 = vpop.permute.xlu0 %1148
        %1150 = vrot.lane.b32.xlu0 %v1131, 19
        %v1151 = vpop.permute.xlu0 %1150
        %1152 = vrot.lane.b32.xlu0 %v1134, 19
        %v1153 = vpop.permute.xlu0 %1152
        %1154 = vrot.lane.b32.xlu0 %v1137, 19
        %v1155 = vpop.permute.xlu0 %1154
        %1156 = vrot.lane.b32.xlu0 %v1129, 19
        %v1157 = vpop.permute.xlu0 %1156
        %1158 = vrot.lane.b32.xlu0 %v1132, 19
        %v1159 = vpop.permute.xlu0 %1158
        %1160 = vrot.lane.b32.xlu0 %v1135, 19
        %v1161 = vpop.permute.xlu0 %1160
        %1162 = vrot.lane.b32.xlu0 %v1138, 19
        %v1163 = vpop.permute.xlu0 %1162
        %v1164 = vsel %vm309, %v1149, %v1157
        %v1165 = vsel %vm309, %v1151, %v1159
        %v1166 = vsel %vm309, %v1153, %v1161
        %v1167 = vsel %vm309, %v1155, %v1163
        %v1168 = vsel %vm309, %v1141, %v1149
        %v1169 = vsel %vm309, %v1143, %v1151
        %v1170 = vsel %vm309, %v1145, %v1153
        %v1171 = vsel %vm309, %v1147, %v1155
        %v1172 = vsel %vm309, %v1157, %v1141
        %v1173 = vsel %vm309, %v1159, %v1143
        %v1174 = vsel %vm309, %v1161, %v1145
        %v1175 = vsel %vm309, %v1163, %v1147
        %1176 = vst [vmem:[#allocation3] sm:$0xff] %v1172
        %1177 = vst [vmem:[#allocation3 + $0x8] sm:$0xff] %v1168
        %1178 = vst [vmem:[#allocation3 + $0x10] sm:$0xff] %v1164
        %1179 = vst [vmem:[#allocation3 + $0x18] sm:$0xff] %v1173
        %1180 = vst [vmem:[#allocation3 + $0x20] sm:$0xff] %v1169
        %1181 = vst [vmem:[#allocation3 + $0x28] sm:$0xff] %v1165
        %1182 = vst [vmem:[#allocation3 + $0x30] sm:$0xff] %v1174
        %1183 = vst [vmem:[#allocation3 + $0x38] sm:$0xff] %v1170
        %1184 = vst [vmem:[#allocation3 + $0x40] sm:$0xff] %v1166
        %1185 = vst [vmem:[#allocation3 + $0x48] sm:$0xff] %v1175
        %1186 = vst [vmem:[#allocation3 + $0x50] sm:$0xff] %v1171
        %1187 = vst [vmem:[#allocation3 + $0x58] sm:$0xff] %v1167
        %1188 = vrot.lane.b32.xlu0 %v1127, 18
        %v1189 = vpop.permute.xlu0 %1188
        %1190 = vrot.lane.b32.xlu0 %v1130, 18
        %v1191 = vpop.permute.xlu0 %1190
        %1192 = vrot.lane.b32.xlu0 %v1133, 18
        %v1193 = vpop.permute.xlu0 %1192
        %1194 = vrot.lane.b32.xlu0 %v1136, 18
        %v1195 = vpop.permute.xlu0 %1194
        %1196 = vrot.lane.b32.xlu0 %v1128, 18
        %v1197 = vpop.permute.xlu0 %1196
        %1198 = vrot.lane.b32.xlu0 %v1131, 18
        %v1199 = vpop.permute.xlu0 %1198
        %1200 = vrot.lane.b32.xlu0 %v1134, 18
        %v1201 = vpop.permute.xlu0 %1200
        %1202 = vrot.lane.b32.xlu0 %v1137, 18
        %v1203 = vpop.permute.xlu0 %1202
        %1204 = vrot.lane.b32.xlu0 %v1129, 18
        %v1205 = vpop.permute.xlu0 %1204
        %1206 = vrot.lane.b32.xlu0 %v1132, 18
        %v1207 = vpop.permute.xlu0 %1206
        %1208 = vrot.lane.b32.xlu0 %v1135, 18
        %v1209 = vpop.permute.xlu0 %1208
        %1210 = vrot.lane.b32.xlu0 %v1138, 18
        %v1211 = vpop.permute.xlu0 %1210
        %v1212 = vsel %vm322, %v1197, %v1205
        %v1213 = vsel %vm322, %v1199, %v1207
        %v1214 = vsel %vm322, %v1201, %v1209
        %v1215 = vsel %vm322, %v1203, %v1211
        %v1216 = vsel %vm322, %v1189, %v1197
        %v1217 = vsel %vm322, %v1191, %v1199
        %v1218 = vsel %vm322, %v1193, %v1201
        %v1219 = vsel %vm322, %v1195, %v1203
        %v1220 = vsel %vm322, %v1205, %v1189
        %v1221 = vsel %vm322, %v1207, %v1191
        %v1222 = vsel %vm322, %v1209, %v1193
        %v1223 = vsel %vm322, %v1211, %v1195
        %1224 = vst [vmem:[#allocation3 + $0x60] sm:$0xff] %v1220
        %1225 = vst [vmem:[#allocation3 + $0x68] sm:$0xff] %v1216
        %1226 = vst [vmem:[#allocation3 + $0x70] sm:$0xff] %v1212
        %1227 = vst [vmem:[#allocation3 + $0x78] sm:$0xff] %v1221
        %1228 = vst [vmem:[#allocation3 + $0x80] sm:$0xff] %v1217
        %1229 = vst [vmem:[#allocation3 + $0x88] sm:$0xff] %v1213
        %1230 = vst [vmem:[#allocation3 + $0x90] sm:$0xff] %v1222
        %1231 = vst [vmem:[#allocation3 + $0x98] sm:$0xff] %v1218
        %1232 = vst [vmem:[#allocation3 + $0xa0] sm:$0xff] %v1214
        %1233 = vst [vmem:[#allocation3 + $0xa8] sm:$0xff] %v1223
        %1234 = vst [vmem:[#allocation3 + $0xb0] sm:$0xff] %v1219
        %1235 = vst [vmem:[#allocation3 + $0xb8] sm:$0xff] %v1215
        %1236 = vrot.lane.b32.xlu0 %v1127, 17
        %v1237 = vpop.permute.xlu0 %1236
        %1238 = vrot.lane.b32.xlu0 %v1130, 17
        %v1239 = vpop.permute.xlu0 %1238
        %1240 = vrot.lane.b32.xlu0 %v1133, 17
        %v1241 = vpop.permute.xlu0 %1240
        %1242 = vrot.lane.b32.xlu0 %v1136, 17
        %v1243 = vpop.permute.xlu0 %1242
        %1244 = vrot.lane.b32.xlu0 %v1128, 17
        %v1245 = vpop.permute.xlu0 %1244
        %1246 = vrot.lane.b32.xlu0 %v1131, 17
        %v1247 = vpop.permute.xlu0 %1246
        %1248 = vrot.lane.b32.xlu0 %v1134, 17
        %v1249 = vpop.permute.xlu0 %1248
        %1250 = vrot.lane.b32.xlu0 %v1137, 17
        %v1251 = vpop.permute.xlu0 %1250
        %1252 = vrot.lane.b32.xlu0 %v1129, 17
        %v1253 = vpop.permute.xlu0 %1252
        %1254 = vrot.lane.b32.xlu0 %v1132, 17
        %v1255 = vpop.permute.xlu0 %1254
        %1256 = vrot.lane.b32.xlu0 %v1135, 17
        %v1257 = vpop.permute.xlu0 %1256
        %1258 = vrot.lane.b32.xlu0 %v1138, 17
        %v1259 = vpop.permute.xlu0 %1258
        %v1260 = vsel %vm344, %v1245, %v1253
        %v1261 = vsel %vm344, %v1247, %v1255
        %v1262 = vsel %vm344, %v1249, %v1257
        %v1263 = vsel %vm344, %v1251, %v1259
        %v1264 = vsel %vm344, %v1237, %v1245
        %v1265 = vsel %vm344, %v1239, %v1247
        %v1266 = vsel %vm344, %v1241, %v1249
        %v1267 = vsel %vm344, %v1243, %v1251
        %v1268 = vsel %vm344, %v1253, %v1237
        %v1269 = vsel %vm344, %v1255, %v1239
        %v1270 = vsel %vm344, %v1257, %v1241
        %v1271 = vsel %vm344, %v1259, %v1243
        %1272 = vst [vmem:[#allocation3 + $0xc0] sm:$0xff] %v1268
        %1273 = vst [vmem:[#allocation3 + $0xc8] sm:$0xff] %v1264
        %1274 = vst [vmem:[#allocation3 + $0xd0] sm:$0xff] %v1260
        %1275 = vst [vmem:[#allocation3 + $0xd8] sm:$0xff] %v1269
        %1276 = vst [vmem:[#allocation3 + $0xe0] sm:$0xff] %v1265
        %1277 = vst [vmem:[#allocation3 + $0xe8] sm:$0xff] %v1261
        %1278 = vst [vmem:[#allocation3 + $0xf0] sm:$0xff] %v1270
        %1279 = vst [vmem:[#allocation3 + $0xf8] sm:$0xff] %v1266
        %1280 = vst [vmem:[#allocation3 + $0x100] sm:$0xff] %v1262
        %1281 = vst [vmem:[#allocation3 + $0x108] sm:$0xff] %v1271
        %1282 = vst [vmem:[#allocation3 + $0x110] sm:$0xff] %v1267
        %1283 = vst [vmem:[#allocation3 + $0x118] sm:$0xff] %v1263
        %1284 = vrot.lane.b32.xlu0 %v1127, 1
        %v1285 = vpop.permute.xlu0 %1284
        %1286 = vrot.lane.b32.xlu0 %v1130, 1
        %v1287 = vpop.permute.xlu0 %1286
        %1288 = vrot.lane.b32.xlu0 %v1133, 1
        %v1289 = vpop.permute.xlu0 %1288
        %1290 = vrot.lane.b32.xlu0 %v1136, 1
        %v1291 = vpop.permute.xlu0 %1290
        %1292 = vrot.lane.b32.xlu0 %v1128, 1
        %v1293 = vpop.permute.xlu0 %1292
        %1294 = vrot.lane.b32.xlu0 %v1131, 1
        %v1295 = vpop.permute.xlu0 %1294
        %1296 = vrot.lane.b32.xlu0 %v1134, 1
        %v1297 = vpop.permute.xlu0 %1296
        %1298 = vrot.lane.b32.xlu0 %v1137, 1
        %v1299 = vpop.permute.xlu0 %1298
        %1300 = vrot.lane.b32.xlu0 %v1129, 1
        %v1301 = vpop.permute.xlu0 %1300
        %1302 = vrot.lane.b32.xlu0 %v1132, 1
        %v1303 = vpop.permute.xlu0 %1302
        %1304 = vrot.lane.b32.xlu0 %v1135, 1
        %v1305 = vpop.permute.xlu0 %1304
        %1306 = vrot.lane.b32.xlu0 %v1138, 1
        %v1307 = vpop.permute.xlu0 %1306
        %v1308 = vsel %vm357, %v1293, %v1301
        %v1309 = vsel %vm357, %v1295, %v1303
        %v1310 = vsel %vm357, %v1297, %v1305
        %v1311 = vsel %vm357, %v1299, %v1307
        %v1312 = vsel %vm357, %v1285, %v1293
        %v1313 = vsel %vm357, %v1287, %v1295
        %v1314 = vsel %vm357, %v1289, %v1297
        %v1315 = vsel %vm357, %v1291, %v1299
        %v1316 = vsel %vm357, %v1301, %v1285
        %v1317 = vsel %vm357, %v1303, %v1287
        %v1318 = vsel %vm357, %v1305, %v1289
        %v1319 = vsel %vm357, %v1307, %v1291
        %1320 = vst [vmem:[#allocation3 + $0x120] sm:$0xff] %v1316
        %1321 = vst [vmem:[#allocation3 + $0x128] sm:$0xff] %v1312
        %1322 = vst [vmem:[#allocation3 + $0x130] sm:$0xff] %v1308
        %1323 = vst [vmem:[#allocation3 + $0x138] sm:$0xff] %v1317
        %1324 = vst [vmem:[#allocation3 + $0x140] sm:$0xff] %v1313
        %1325 = vst [vmem:[#allocation3 + $0x148] sm:$0xff] %v1309
        %1326 = vst [vmem:[#allocation3 + $0x150] sm:$0xff] %v1318
        %1327 = vst [vmem:[#allocation3 + $0x158] sm:$0xff] %v1314
        %1328 = vst [vmem:[#allocation3 + $0x160] sm:$0xff] %v1310
        %1329 = vst [vmem:[#allocation3 + $0x168] sm:$0xff] %v1319
        %1330 = vst [vmem:[#allocation3 + $0x170] sm:$0xff] %v1315
        %1331 = vst [vmem:[#allocation3 + $0x178] sm:$0xff] %v1311
        %1332 = vst [vmem:[#allocation3 + $0x180] sm:$0xff] %v1127
        %1333 = vst [vmem:[#allocation3 + $0x188] sm:$0xff] %v1128
        %1334 = vst [vmem:[#allocation3 + $0x190] sm:$0xff] %v1129
        %1335 = vst [vmem:[#allocation3 + $0x198] sm:$0xff] %v1130
        %1336 = vst [vmem:[#allocation3 + $0x1a0] sm:$0xff] %v1131
        %1337 = vst [vmem:[#allocation3 + $0x1a8] sm:$0xff] %v1132
        %1338 = vst [vmem:[#allocation3 + $0x1b0] sm:$0xff] %v1133
        %1339 = vst [vmem:[#allocation3 + $0x1b8] sm:$0xff] %v1134
        %1340 = vst [vmem:[#allocation3 + $0x1c0] sm:$0xff] %v1135
        %1341 = vst [vmem:[#allocation3 + $0x1c8] sm:$0xff] %v1136
        %1342 = vst [vmem:[#allocation3 + $0x1d0] sm:$0xff] %v1137
        %1343 = vst [vmem:[#allocation3 + $0x1d8] sm:$0xff] %v1138
        %1344 = vrot.lane.b32.xlu0 %v1127, 127
        %v1345 = vpop.permute.xlu0 %1344
        %1346 = vrot.lane.b32.xlu0 %v1130, 127
        %v1347 = vpop.permute.xlu0 %1346
        %1348 = vrot.lane.b32.xlu0 %v1133, 127
        %v1349 = vpop.permute.xlu0 %1348
        %1350 = vrot.lane.b32.xlu0 %v1136, 127
        %v1351 = vpop.permute.xlu0 %1350
        %1352 = vrot.lane.b32.xlu0 %v1128, 127
        %v1353 = vpop.permute.xlu0 %1352
        %1354 = vrot.lane.b32.xlu0 %v1131, 127
        %v1355 = vpop.permute.xlu0 %1354
        %1356 = vrot.lane.b32.xlu0 %v1134, 127
        %v1357 = vpop.permute.xlu0 %1356
        %1358 = vrot.lane.b32.xlu0 %v1137, 127
        %v1359 = vpop.permute.xlu0 %1358
        %1360 = vrot.lane.b32.xlu0 %v1129, 127
        %v1361 = vpop.permute.xlu0 %1360
        %1362 = vrot.lane.b32.xlu0 %v1132, 127
        %v1363 = vpop.permute.xlu0 %1362
        %1364 = vrot.lane.b32.xlu0 %v1135, 127
        %v1365 = vpop.permute.xlu0 %1364
        %1366 = vrot.lane.b32.xlu0 %v1138, 127
        %v1367 = vpop.permute.xlu0 %1366
        %v1368 = vsel %vm382, %v1353, %v1361
        %v1369 = vsel %vm382, %v1355, %v1363
        %v1370 = vsel %vm382, %v1357, %v1365
        %v1371 = vsel %vm382, %v1359, %v1367
        %v1372 = vsel %vm382, %v1345, %v1353
        %v1373 = vsel %vm382, %v1347, %v1355
        %v1374 = vsel %vm382, %v1349, %v1357
        %v1375 = vsel %vm382, %v1351, %v1359
        %v1376 = vsel %vm382, %v1361, %v1345
        %v1377 = vsel %vm382, %v1363, %v1347
        %v1378 = vsel %vm382, %v1365, %v1349
        %v1379 = vsel %vm382, %v1367, %v1351
        %1380 = vst [vmem:[#allocation3 + $0x1e0] sm:$0xff] %v1372
        %1381 = vst [vmem:[#allocation3 + $0x1e8] sm:$0xff] %v1368
        %1382 = vst [vmem:[#allocation3 + $0x1f0] sm:$0xff] %v1376
        %1383 = vst [vmem:[#allocation3 + $0x1f8] sm:$0xff] %v1373
        %1384 = vst [vmem:[#allocation3 + $0x200] sm:$0xff] %v1369
        %1385 = vst [vmem:[#allocation3 + $0x208] sm:$0xff] %v1377
        %1386 = vst [vmem:[#allocation3 + $0x210] sm:$0xff] %v1374
        %1387 = vst [vmem:[#allocation3 + $0x218] sm:$0xff] %v1370
        %1388 = vst [vmem:[#allocation3 + $0x220] sm:$0xff] %v1378
        %1389 = vst [vmem:[#allocation3 + $0x228] sm:$0xff] %v1375
        %1390 = vst [vmem:[#allocation3 + $0x230] sm:$0xff] %v1371
        %1391 = vst [vmem:[#allocation3 + $0x238] sm:$0xff] %v1379
        %1392 = vrot.lane.b32.xlu0 %v1127, 111
        %v1393 = vpop.permute.xlu0 %1392
        %1394 = vrot.lane.b32.xlu0 %v1130, 111
        %v1395 = vpop.permute.xlu0 %1394
        %1396 = vrot.lane.b32.xlu0 %v1133, 111
        %v1397 = vpop.permute.xlu0 %1396
        %1398 = vrot.lane.b32.xlu0 %v1136, 111
        %v1399 = vpop.permute.xlu0 %1398
        %1400 = vrot.lane.b32.xlu0 %v1128, 111
        %v1401 = vpop.permute.xlu0 %1400
        %1402 = vrot.lane.b32.xlu0 %v1131, 111
        %v1403 = vpop.permute.xlu0 %1402
        %1404 = vrot.lane.b32.xlu0 %v1134, 111
        %v1405 = vpop.permute.xlu0 %1404
        %1406 = vrot.lane.b32.xlu0 %v1137, 111
        %v1407 = vpop.permute.xlu0 %1406
        %1408 = vrot.lane.b32.xlu0 %v1129, 111
        %v1409 = vpop.permute.xlu0 %1408
        %1410 = vrot.lane.b32.xlu0 %v1132, 111
        %v1411 = vpop.permute.xlu0 %1410
        %1412 = vrot.lane.b32.xlu0 %v1135, 111
        %v1413 = vpop.permute.xlu0 %1412
        %1414 = vrot.lane.b32.xlu0 %v1138, 111
        %v1415 = vpop.permute.xlu0 %1414
        %v1416 = vsel %vm404, %v1401, %v1409
        %v1417 = vsel %vm404, %v1403, %v1411
        %v1418 = vsel %vm404, %v1405, %v1413
        %v1419 = vsel %vm404, %v1407, %v1415
        %v1420 = vsel %vm404, %v1393, %v1401
        %v1421 = vsel %vm404, %v1395, %v1403
        %v1422 = vsel %vm404, %v1397, %v1405
        %v1423 = vsel %vm404, %v1399, %v1407
        %v1424 = vsel %vm404, %v1409, %v1393
        %v1425 = vsel %vm404, %v1411, %v1395
        %v1426 = vsel %vm404, %v1413, %v1397
        %v1427 = vsel %vm404, %v1415, %v1399
        %1428 = vst [vmem:[#allocation3 + $0x240] sm:$0xff] %v1420
        %1429 = vst [vmem:[#allocation3 + $0x248] sm:$0xff] %v1416
        %1430 = vst [vmem:[#allocation3 + $0x250] sm:$0xff] %v1424
        %1431 = vst [vmem:[#allocation3 + $0x258] sm:$0xff] %v1421
        %1432 = vst [vmem:[#allocation3 + $0x260] sm:$0xff] %v1417
        %1433 = vst [vmem:[#allocation3 + $0x268] sm:$0xff] %v1425
        %1434 = vst [vmem:[#allocation3 + $0x270] sm:$0xff] %v1422
        %1435 = vst [vmem:[#allocation3 + $0x278] sm:$0xff] %v1418
        %1436 = vst [vmem:[#allocation3 + $0x280] sm:$0xff] %v1426
        %1437 = vst [vmem:[#allocation3 + $0x288] sm:$0xff] %v1423
        %1438 = vst [vmem:[#allocation3 + $0x290] sm:$0xff] %v1419
        %1439 = vst [vmem:[#allocation3 + $0x298] sm:$0xff] %v1427
        %1440 = vrot.lane.b32.xlu0 %v1127, 110
        %v1441 = vpop.permute.xlu0 %1440
        %1442 = vrot.lane.b32.xlu0 %v1130, 110
        %v1443 = vpop.permute.xlu0 %1442
        %1444 = vrot.lane.b32.xlu0 %v1133, 110
        %v1445 = vpop.permute.xlu0 %1444
        %1446 = vrot.lane.b32.xlu0 %v1136, 110
        %v1447 = vpop.permute.xlu0 %1446
        %1448 = vrot.lane.b32.xlu0 %v1128, 110
        %v1449 = vpop.permute.xlu0 %1448
        %1450 = vrot.lane.b32.xlu0 %v1131, 110
        %v1451 = vpop.permute.xlu0 %1450
        %1452 = vrot.lane.b32.xlu0 %v1134, 110
        %v1453 = vpop.permute.xlu0 %1452
        %1454 = vrot.lane.b32.xlu0 %v1137, 110
        %v1455 = vpop.permute.xlu0 %1454
        %1456 = vrot.lane.b32.xlu0 %v1129, 110
        %v1457 = vpop.permute.xlu0 %1456
        %1458 = vrot.lane.b32.xlu0 %v1132, 110
        %v1459 = vpop.permute.xlu0 %1458
        %1460 = vrot.lane.b32.xlu0 %v1135, 110
        %v1461 = vpop.permute.xlu0 %1460
        %1462 = vrot.lane.b32.xlu0 %v1138, 110
        %v1463 = vpop.permute.xlu0 %1462
        %v1464 = vsel %vm417, %v1449, %v1457
        %v1465 = vsel %vm417, %v1451, %v1459
        %v1466 = vsel %vm417, %v1453, %v1461
        %v1467 = vsel %vm417, %v1455, %v1463
        %v1468 = vsel %vm417, %v1441, %v1449
        %v1469 = vsel %vm417, %v1443, %v1451
        %v1470 = vsel %vm417, %v1445, %v1453
        %v1471 = vsel %vm417, %v1447, %v1455
        %v1472 = vsel %vm417, %v1457, %v1441
        %v1473 = vsel %vm417, %v1459, %v1443
        %v1474 = vsel %vm417, %v1461, %v1445
        %v1475 = vsel %vm417, %v1463, %v1447
        %1476 = vst [vmem:[#allocation3 + $0x2a0] sm:$0xff] %v1468
        %1477 = vst [vmem:[#allocation3 + $0x2a8] sm:$0xff] %v1464
        %1478 = vst [vmem:[#allocation3 + $0x2b0] sm:$0xff] %v1472
        %1479 = vst [vmem:[#allocation3 + $0x2b8] sm:$0xff] %v1469
        %1480 = vst [vmem:[#allocation3 + $0x2c0] sm:$0xff] %v1465
        %1481 = vst [vmem:[#allocation3 + $0x2c8] sm:$0xff] %v1473
        %1482 = vst [vmem:[#allocation3 + $0x2d0] sm:$0xff] %v1470
        %1483 = vst [vmem:[#allocation3 + $0x2d8] sm:$0xff] %v1466
        %1484 = vst [vmem:[#allocation3 + $0x2e0] sm:$0xff] %v1474
        %1485 = vst [vmem:[#allocation3 + $0x2e8] sm:$0xff] %v1471
        %1486 = vst [vmem:[#allocation3 + $0x2f0] sm:$0xff] %v1467
        %1487 = vst [vmem:[#allocation3 + $0x2f8] sm:$0xff] %v1475
        %1488 = vrot.lane.b32.xlu0 %v1127, 109
        %v1489 = vpop.permute.xlu0 %1488
        %1490 = vrot.lane.b32.xlu0 %v1130, 109
        %v1491 = vpop.permute.xlu0 %1490
        %1492 = vrot.lane.b32.xlu0 %v1133, 109
        %v1493 = vpop.permute.xlu0 %1492
        %1494 = vrot.lane.b32.xlu0 %v1136, 109
        %v1495 = vpop.permute.xlu0 %1494
        %1496 = vrot.lane.b32.xlu0 %v1128, 109
        %v1497 = vpop.permute.xlu0 %1496
        %1498 = vrot.lane.b32.xlu0 %v1131, 109
        %v1499 = vpop.permute.xlu0 %1498
        %1500 = vrot.lane.b32.xlu0 %v1134, 109
        %v1501 = vpop.permute.xlu0 %1500
        %1502 = vrot.lane.b32.xlu0 %v1137, 109
        %v1503 = vpop.permute.xlu0 %1502
        %1504 = vrot.lane.b32.xlu0 %v1129, 109
        %v1505 = vpop.permute.xlu0 %1504
        %1506 = vrot.lane.b32.xlu0 %v1132, 109
        %v1507 = vpop.permute.xlu0 %1506
        %1508 = vrot.lane.b32.xlu0 %v1135, 109
        %v1509 = vpop.permute.xlu0 %1508
        %1510 = vrot.lane.b32.xlu0 %v1138, 109
        %v1511 = vpop.permute.xlu0 %1510
        %v1512 = vsel %vm439, %v1497, %v1505
        %v1513 = vsel %vm439, %v1499, %v1507
        %v1514 = vsel %vm439, %v1501, %v1509
        %v1515 = vsel %vm439, %v1503, %v1511
        %v1516 = vsel %vm439, %v1489, %v1497
        %v1517 = vsel %vm439, %v1491, %v1499
        %v1518 = vsel %vm439, %v1493, %v1501
        %v1519 = vsel %vm439, %v1495, %v1503
        %v1520 = vsel %vm439, %v1505, %v1489
        %v1521 = vsel %vm439, %v1507, %v1491
        %v1522 = vsel %vm439, %v1509, %v1493
        %v1523 = vsel %vm439, %v1511, %v1495
        %1524 = vst [vmem:[#allocation3 + $0x300] sm:$0xff] %v1516
        %1525 = vst [vmem:[#allocation3 + $0x308] sm:$0xff] %v1512
        %1526 = vst [vmem:[#allocation3 + $0x310] sm:$0xff] %v1520
        %1527 = vst [vmem:[#allocation3 + $0x318] sm:$0xff] %v1517
        %1528 = vst [vmem:[#allocation3 + $0x320] sm:$0xff] %v1513
        %1529 = vst [vmem:[#allocation3 + $0x328] sm:$0xff] %v1521
        %1530 = vst [vmem:[#allocation3 + $0x330] sm:$0xff] %v1518
        %1531 = vst [vmem:[#allocation3 + $0x338] sm:$0xff] %v1514
        %1532 = vst [vmem:[#allocation3 + $0x340] sm:$0xff] %v1522
        %1533 = vst [vmem:[#allocation3 + $0x348] sm:$0xff] %v1519
        %1534 = vst [vmem:[#allocation3 + $0x350] sm:$0xff] %v1515
        %1535 = vst [vmem:[#allocation3 + $0x358] sm:$0xff] %v1523
        %v1536 = vld [vmem:[%s3] sm:$0x3f]
        %v1537 = vld [vmem:[#allocation3] sm:$0xff]
        %v1538 = vld [vmem:[#allocation3 + $0x8] sm:$0xff]
        %v1539 = vld [vmem:[#allocation3 + $0x10] sm:$0xff]
        %v1540 = vld [vmem:[#allocation3 + $0x18] sm:$0xff]
        %v1541 = vld [vmem:[#allocation3 + $0x20] sm:$0xff]
        %v1542 = vld [vmem:[#allocation3 + $0x28] sm:$0xff]
        %v1543 = vld [vmem:[#allocation3 + $0x30] sm:$0xff]
        %v1544 = vld [vmem:[#allocation3 + $0x38] sm:$0xff]
        %v1545 = vld [vmem:[#allocation3 + $0x40] sm:$0xff]
        %v1546 = vld [vmem:[#allocation3 + $0x48] sm:$0xff]
        %v1547 = vld [vmem:[#allocation3 + $0x50] sm:$0xff]
        %v1548 = vld [vmem:[#allocation3 + $0x58] sm:$0xff]
        %v1549 = vld [vmem:[#allocation3 + $0x60] sm:$0xff]
        %v1550 = vld [vmem:[#allocation3 + $0x68] sm:$0xff]
        %v1551 = vld [vmem:[#allocation3 + $0x70] sm:$0xff]
        %v1552 = vld [vmem:[#allocation3 + $0x78] sm:$0xff]
        %v1553 = vld [vmem:[#allocation3 + $0x80] sm:$0xff]
        %v1554 = vld [vmem:[#allocation3 + $0x88] sm:$0xff]
        %v1555 = vld [vmem:[#allocation3 + $0x90] sm:$0xff]
        %v1556 = vld [vmem:[#allocation3 + $0x98] sm:$0xff]
        %v1557 = vld [vmem:[#allocation3 + $0xa0] sm:$0xff]
        %v1558 = vld [vmem:[#allocation3 + $0xa8] sm:$0xff]
        %v1559 = vld [vmem:[#allocation3 + $0xb0] sm:$0xff]
        %v1560 = vld [vmem:[#allocation3 + $0xb8] sm:$0xff]
        %v1561 = vld [vmem:[#allocation3 + $0xc0] sm:$0xff]
        %v1562 = vld [vmem:[#allocation3 + $0xc8] sm:$0xff]
        %v1563 = vld [vmem:[#allocation3 + $0xd0] sm:$0xff]
        %v1564 = vld [vmem:[#allocation3 + $0xd8] sm:$0xff]
        %v1565 = vld [vmem:[#allocation3 + $0xe0] sm:$0xff]
        %v1566 = vld [vmem:[#allocation3 + $0xe8] sm:$0xff]
        %v1567 = vld [vmem:[#allocation3 + $0xf0] sm:$0xff]
        %v1568 = vld [vmem:[#allocation3 + $0xf8] sm:$0xff]
        %v1569 = vld [vmem:[#allocation3 + $0x100] sm:$0xff]
        %v1570 = vld [vmem:[#allocation3 + $0x108] sm:$0xff]
        %v1571 = vld [vmem:[#allocation3 + $0x110] sm:$0xff]
        %v1572 = vld [vmem:[#allocation3 + $0x118] sm:$0xff]
        %v1573 = vld [vmem:[#allocation3 + $0x120] sm:$0xff]
        %v1574 = vld [vmem:[#allocation3 + $0x128] sm:$0xff]
        %v1575 = vld [vmem:[#allocation3 + $0x130] sm:$0xff]
        %v1576 = vld [vmem:[#allocation3 + $0x138] sm:$0xff]
        %v1577 = vld [vmem:[#allocation3 + $0x140] sm:$0xff]
        %v1578 = vld [vmem:[#allocation3 + $0x148] sm:$0xff]
        %v1579 = vld [vmem:[#allocation3 + $0x150] sm:$0xff]
        %v1580 = vld [vmem:[#allocation3 + $0x158] sm:$0xff]
        %v1581 = vld [vmem:[#allocation3 + $0x160] sm:$0xff]
        %v1582 = vld [vmem:[#allocation3 + $0x168] sm:$0xff]
        %v1583 = vld [vmem:[#allocation3 + $0x170] sm:$0xff]
        %v1584 = vld [vmem:[#allocation3 + $0x178] sm:$0xff]
        %v1585 = vld [vmem:[#allocation3 + $0x180] sm:$0xff]
        %v1586 = vld [vmem:[#allocation3 + $0x188] sm:$0xff]
        %v1587 = vld [vmem:[#allocation3 + $0x190] sm:$0xff]
        %v1588 = vld [vmem:[#allocation3 + $0x198] sm:$0xff]
        %v1589 = vld [vmem:[#allocation3 + $0x1a0] sm:$0xff]
        %v1590 = vld [vmem:[#allocation3 + $0x1a8] sm:$0xff]
        %v1591 = vld [vmem:[#allocation3 + $0x1b0] sm:$0xff]
        %v1592 = vld [vmem:[#allocation3 + $0x1b8] sm:$0xff]
        %v1593 = vld [vmem:[#allocation3 + $0x1c0] sm:$0xff]
        %v1594 = vld [vmem:[#allocation3 + $0x1c8] sm:$0xff]
        %v1595 = vld [vmem:[#allocation3 + $0x1d0] sm:$0xff]
        %v1596 = vld [vmem:[#allocation3 + $0x1d8] sm:$0xff]
        %v1597 = vld [vmem:[#allocation3 + $0x1e0] sm:$0xff]
        %v1598 = vld [vmem:[#allocation3 + $0x1e8] sm:$0xff]
        %v1599 = vld [vmem:[#allocation3 + $0x1f0] sm:$0xff]
        %v1600 = vld [vmem:[#allocation3 + $0x1f8] sm:$0xff]
        %v1601 = vld [vmem:[#allocation3 + $0x200] sm:$0xff]
        %v1602 = vld [vmem:[#allocation3 + $0x208] sm:$0xff]
        %v1603 = vld [vmem:[#allocation3 + $0x210] sm:$0xff]
        %v1604 = vld [vmem:[#allocation3 + $0x218] sm:$0xff]
        %v1605 = vld [vmem:[#allocation3 + $0x220] sm:$0xff]
        %v1606 = vld [vmem:[#allocation3 + $0x228] sm:$0xff]
        %v1607 = vld [vmem:[#allocation3 + $0x230] sm:$0xff]
        %v1608 = vld [vmem:[#allocation3 + $0x238] sm:$0xff]
        %v1609 = vld [vmem:[#allocation3 + $0x240] sm:$0xff]
        %v1610 = vld [vmem:[#allocation3 + $0x248] sm:$0xff]
        %v1611 = vld [vmem:[#allocation3 + $0x250] sm:$0xff]
        %v1612 = vld [vmem:[#allocation3 + $0x258] sm:$0xff]
        %v1613 = vld [vmem:[#allocation3 + $0x260] sm:$0xff]
        %v1614 = vld [vmem:[#allocation3 + $0x268] sm:$0xff]
        %v1615 = vld [vmem:[#allocation3 + $0x270] sm:$0xff]
        %v1616 = vld [vmem:[#allocation3 + $0x278] sm:$0xff]
        %v1617 = vld [vmem:[#allocation3 + $0x280] sm:$0xff]
        %v1618 = vld [vmem:[#allocation3 + $0x288] sm:$0xff]
        %v1619 = vld [vmem:[#allocation3 + $0x290] sm:$0xff]
        %v1620 = vld [vmem:[#allocation3 + $0x298] sm:$0xff]
        %v1621 = vld [vmem:[#allocation3 + $0x2a0] sm:$0xff]
        %v1622 = vld [vmem:[#allocation3 + $0x2a8] sm:$0xff]
        %v1623 = vld [vmem:[#allocation3 + $0x2b0] sm:$0xff]
        %v1624 = vld [vmem:[#allocation3 + $0x2b8] sm:$0xff]
        %v1625 = vld [vmem:[#allocation3 + $0x2c0] sm:$0xff]
        %v1626 = vld [vmem:[#allocation3 + $0x2c8] sm:$0xff]
        %v1627 = vld [vmem:[#allocation3 + $0x2d0] sm:$0xff]
        %v1628 = vld [vmem:[#allocation3 + $0x2d8] sm:$0xff]
        %v1629 = vld [vmem:[#allocation3 + $0x2e0] sm:$0xff]
        %v1630 = vld [vmem:[#allocation3 + $0x2e8] sm:$0xff]
        %v1631 = vld [vmem:[#allocation3 + $0x2f0] sm:$0xff]
        %v1632 = vld [vmem:[#allocation3 + $0x2f8] sm:$0xff]
        %v1633 = vld [vmem:[#allocation3 + $0x300] sm:$0xff]
        %v1634 = vld [vmem:[#allocation3 + $0x308] sm:$0xff]
        %v1635 = vld [vmem:[#allocation3 + $0x310] sm:$0xff]
        %v1636 = vld [vmem:[#allocation3 + $0x318] sm:$0xff]
        %v1637 = vld [vmem:[#allocation3 + $0x320] sm:$0xff]
        %v1638 = vld [vmem:[#allocation3 + $0x328] sm:$0xff]
        %v1639 = vld [vmem:[#allocation3 + $0x330] sm:$0xff]
        %v1640 = vld [vmem:[#allocation3 + $0x338] sm:$0xff]
        %v1641 = vld [vmem:[#allocation3 + $0x340] sm:$0xff]
        %v1642 = vld [vmem:[#allocation3 + $0x348] sm:$0xff]
        %v1643 = vld [vmem:[#allocation3 + $0x350] sm:$0xff]
        %v1644 = vld [vmem:[#allocation3 + $0x358] sm:$0xff]
        %v1645 = vpack.c.bf16 %v1540, %v1537
        %v1646 = vpack.c.bf16 %v1541, %v1538
        %v1647 = vpack.c.bf16 %v1542, %v1539
        %v1648 = vpack.c.bf16 %v1546, %v1543
        %v1649 = vpack.c.bf16 %v1547, %v1544
        %v1650 = vpack.c.bf16 %v1548, %v1545
        %v1651 = vpack.c.bf16 %v1552, %v1549
        %v1652 = vpack.c.bf16 %v1553, %v1550
        %v1653 = vpack.c.bf16 %v1554, %v1551
        %v1654 = vpack.c.bf16 %v1558, %v1555
        %v1655 = vpack.c.bf16 %v1559, %v1556
        %v1656 = vpack.c.bf16 %v1560, %v1557
        %v1657 = vpack.c.bf16 %v1564, %v1561
        %v1658 = vpack.c.bf16 %v1565, %v1562
        %v1659 = vpack.c.bf16 %v1566, %v1563
        %v1660 = vpack.c.bf16 %v1570, %v1567
        %v1661 = vpack.c.bf16 %v1571, %v1568
        %v1662 = vpack.c.bf16 %v1572, %v1569
        %v1663 = vpack.c.bf16 %v1576, %v1573
        %v1664 = vpack.c.bf16 %v1577, %v1574
        %v1665 = vpack.c.bf16 %v1578, %v1575
        %v1666 = vpack.c.bf16 %v1582, %v1579
        %v1667 = vpack.c.bf16 %v1583, %v1580
        %v1668 = vpack.c.bf16 %v1584, %v1581
        %v1669 = vpack.c.bf16 %v1588, %v1585
        %v1670 = vpack.c.bf16 %v1589, %v1586
        %v1671 = vpack.c.bf16 %v1590, %v1587
        %v1672 = vpack.c.bf16 %v1594, %v1591
        %v1673 = vpack.c.bf16 %v1595, %v1592
        %v1674 = vpack.c.bf16 %v1596, %v1593
        %v1675 = vpack.c.bf16 %v1600, %v1597
        %v1676 = vpack.c.bf16 %v1601, %v1598
        %v1677 = vpack.c.bf16 %v1602, %v1599
        %v1678 = vpack.c.bf16 %v1606, %v1603
        %v1679 = vpack.c.bf16 %v1607, %v1604
        %v1680 = vpack.c.bf16 %v1608, %v1605
        %v1681 = vpack.c.bf16 %v1612, %v1609
        %v1682 = vpack.c.bf16 %v1613, %v1610
        %v1683 = vpack.c.bf16 %v1614, %v1611
        %v1684 = vpack.c.bf16 %v1618, %v1615
        %v1685 = vpack.c.bf16 %v1619, %v1616
        %v1686 = vpack.c.bf16 %v1620, %v1617
        %v1687 = vpack.c.bf16 %v1624, %v1621
        %v1688 = vpack.c.bf16 %v1625, %v1622
        %v1689 = vpack.c.bf16 %v1626, %v1623
        %v1690 = vpack.c.bf16 %v1630, %v1627
        %v1691 = vpack.c.bf16 %v1631, %v1628
        %v1692 = vpack.c.bf16 %v1632, %v1629
        %v1693 = vpack.c.bf16 %v1636, %v1633
        %v1694 = vpack.c.bf16 %v1637, %v1634
        %v1695 = vpack.c.bf16 %v1638, %v1635
        %v1696 = vpack.c.bf16 %v1642, %v1639
        %v1697 = vpack.c.bf16 %v1643, %v1640
        %v1698 = vpack.c.bf16 %v1644, %v1641
        %v1699 = vld [vmem:[%s4] sm:$0xf]
        %1701 = vset.pattern.permute.xlu0 0
        %1702 = vperm.xlu0 %1701, %v1699
        %v1703 = vpop.permute.xlu0 %1702
        %v1706 = vcombine.high %v1536, %v1536
        %v1708 = vunpack.c.l.s4 1983009808
        %v1709 = vunpack.c.0.s8 %v1708
        %v1710 = vlaneseq
        %v1711 = vshrl.u32 %v1710, 7
        %v1712 = vsub.s32 %v1709, %v1711
        %v1713 = vrot.slane %v1536, %v1712
        %v1715 = vunpack.c.l.s4 1983009808
        %v1716 = vunpack.c.0.s8 %v1715
        %v1717 = vlaneseq
        %v1718 = vshrl.u32 %v1717, 7
        %v1719 = vsub.s32 %v1716, %v1718
        %v1720 = vrot.slane %v1706, %v1719
        %v1721 = vcombine.high %v1713, %v1713
        %v1725 = vsel %vm867, %v1720, 0
        %1727 = vmatprep.subr.bf16.mxu0 %v1646
        %1728 = vmatpush1.bf16.msra.mxu0 %v1645
        %1729 = vmatprep.subr.bf16.mxu0 %v1649
        %1730 = vmatpush1.bf16.msra.mxu0 %v1648
        %1731 = vmatprep.subr.bf16.mxu0 %v1652
        %1732 = vmatpush1.bf16.msra.mxu0 %v1651
        %1733 = vmatprep.subr.bf16.mxu0 %v1655
        %1734 = vmatpush1.bf16.msra.mxu0 %v1654
        %1735 = vmatprep.subr.bf16.mxu0 %v1658
        %1736 = vmatpush1.bf16.msra.mxu0 %v1657
        %1737 = vmatprep.subr.bf16.mxu0 %v1661
        %1738 = vmatpush1.bf16.msra.mxu0 %v1660
        %1739 = vmatprep.subr.bf16.mxu0 %v1664
        %1740 = vmatpush1.bf16.msra.mxu0 %v1663
        %1741 = vmatprep.subr.bf16.mxu0 %v1667
        %1742 = vmatpush1.bf16.msra.mxu0 %v1666
        %1743 = vmatprep.subr.bf16.mxu0 %v1670
        %1744 = vmatpush1.bf16.msra.mxu0 %v1669
        %1745 = vmatprep.subr.bf16.mxu0 %v1673
        %1746 = vmatpush1.bf16.msra.mxu0 %v1672
        %1747 = vmatprep.subr.bf16.mxu0 %v1676
        %1748 = vmatpush1.bf16.msra.mxu0 %v1675
        %1749 = vmatprep.subr.bf16.mxu0 %v1679
        %1750 = vmatpush1.bf16.msra.mxu0 %v1678
        %1751 = vmatprep.subr.bf16.mxu0 %v1682
        %1752 = vmatpush1.bf16.msra.mxu0 %v1681
        %1753 = vmatprep.subr.bf16.mxu0 %v1685
        %1754 = vmatpush1.bf16.msra.mxu0 %v1684
        %1755 = vmatprep.subr.bf16.mxu0 %v1688
        %1756 = vmatpush1.bf16.msra.mxu0 %v1687
        %1757 = vmatprep.subr.bf16.mxu0 %v1691
        %1758 = vmatpush1.bf16.msra.mxu0 %v1690
        %1759 = vmatprep.mubr.bf16.mxu0 %v1721
        %1760 = vmatmul.mubr.bf16.gmra.mrb[0].mxu0 %v1713
        %v1761 = vpop.f32.mrb[0].mxu0
        %v1762 = vadd.f32 %v1703, %v1761
        %v1763 = vpop.f32.mrb[0].mxu0
        %v1764 = vadd.f32 %v1703, %v1763
        %v1765 = vpop.f32.mrb[0].mxu0
        %v1766 = vpop.f32.mrb[0].mxu0
        %1767 = vdwg.mxu0
        %1768 = vmatprep.subr.bf16.mxu0 %v1694
        %1769 = vmatpush1.bf16.msra.mxu0 %v1693
        %1770 = vmatprep.subr.bf16.mxu0 %v1697
        %1771 = vmatpush1.bf16.msra.mxu0 %v1696
        %1772 = vmatprep.subr.bf16.mxu0 0
        %1773 = vmatpush1.bf16.msra.mxu0 0
        %1774 = vmatprep.subr.bf16.mxu0 0
        %1775 = vmatpush1.bf16.msra.mxu0 0
        %1776 = vmatprep.subr.bf16.mxu0 0
        %1777 = vmatpush1.bf16.msra.mxu0 0
        %1778 = vmatprep.subr.bf16.mxu0 0
        %1779 = vmatpush1.bf16.msra.mxu0 0
        %1780 = vmatprep.subr.bf16.mxu0 0
        %1781 = vmatpush1.bf16.msra.mxu0 0
        %1782 = vmatprep.subr.bf16.mxu0 0
        %1783 = vmatpush1.bf16.msra.mxu0 0
        %1784 = vmatprep.subr.bf16.mxu0 0
        %1785 = vmatpush1.bf16.msra.mxu0 0
        %1786 = vmatprep.subr.bf16.mxu0 0
        %1787 = vmatpush1.bf16.msra.mxu0 0
        %1788 = vmatprep.subr.bf16.mxu0 0
        %1789 = vmatpush1.bf16.msra.mxu0 0
        %1790 = vmatprep.subr.bf16.mxu0 0
        %1791 = vmatpush1.bf16.msra.mxu0 0
        %1792 = vmatprep.subr.bf16.mxu0 0
        %1793 = vmatpush1.bf16.msra.mxu0 0
        %1794 = vmatprep.subr.bf16.mxu0 0
        %1795 = vmatpush1.bf16.msra.mxu0 0
        %1796 = vmatprep.subr.bf16.mxu0 0
        %1797 = vmatpush1.bf16.msra.mxu0 0
        %1798 = vmatprep.subr.bf16.mxu0 0
        %1799 = vmatpush1.bf16.msra.mxu0 0
        %1800 = vmatprep.mubr.bf16.mxu0 0
        %1801 = vmatmul.mubr.bf16.gmra.mrb[0].mxu0 %v1725
        %v1802 = vpop.f32.mrb[0].mxu0
        %v1803 = vadd.f32 %v1762, %v1802
        %v1804 = vpop.f32.mrb[0].mxu0
        %v1805 = vadd.f32 %v1764, %v1804
        %v1806 = vpop.f32.mrb[0].mxu0
        %v1807 = vpop.f32.mrb[0].mxu0
        %1808 = vdwg.mxu0
        %1809 = vmatprep.subr.bf16.mxu0 0
        %1810 = vmatpush1.bf16.msra.mxu0 %v1647
        %1811 = vmatprep.subr.bf16.mxu0 0
        %1812 = vmatpush1.bf16.msra.mxu0 %v1650
        %1813 = vmatprep.subr.bf16.mxu0 0
        %1814 = vmatpush1.bf16.msra.mxu0 %v1653
        %1815 = vmatprep.subr.bf16.mxu0 0
        %1816 = vmatpush1.bf16.msra.mxu0 %v1656
        %1817 = vmatprep.subr.bf16.mxu0 0
        %1818 = vmatpush1.bf16.msra.mxu0 %v1659
        %1819 = vmatprep.subr.bf16.mxu0 0
        %1820 = vmatpush1.bf16.msra.mxu0 %v1662
        %1821 = vmatprep.subr.bf16.mxu0 0
        %1822 = vmatpush1.bf16.msra.mxu0 %v1665
        %1823 = vmatprep.subr.bf16.mxu0 0
        %1824 = vmatpush1.bf16.msra.mxu0 %v1668
        %1825 = vmatprep.subr.bf16.mxu0 0
        %1826 = vmatpush1.bf16.msra.mxu0 %v1671
        %1827 = vmatprep.subr.bf16.mxu0 0
        %1828 = vmatpush1.bf16.msra.mxu0 %v1674
        %1829 = vmatprep.subr.bf16.mxu0 0
        %1830 = vmatpush1.bf16.msra.mxu0 %v1677
        %1831 = vmatprep.subr.bf16.mxu0 0
        %1832 = vmatpush1.bf16.msra.mxu0 %v1680
        %1833 = vmatprep.subr.bf16.mxu0 0
        %1834 = vmatpush1.bf16.msra.mxu0 %v1683
        %1835 = vmatprep.subr.bf16.mxu0 0
        %1836 = vmatpush1.bf16.msra.mxu0 %v1686
        %1837 = vmatprep.subr.bf16.mxu0 0
        %1838 = vmatpush1.bf16.msra.mxu0 %v1689
        %1839 = vmatprep.subr.bf16.mxu0 0
        %1840 = vmatpush1.bf16.msra.mxu0 %v1692
        %1841 = vmatprep.mubr.bf16.mxu0 %v1721
        %1842 = vmatmul.mubr.bf16.gmra.mrb[0].mxu0 %v1713
        %v1843 = vpop.f32.mrb[0].mxu0
        %v1844 = vadd.f32 %v1703, %v1843
        %v1845 = vpop.f32.mrb[0].mxu0
        %v1846 = vpop.f32.mrb[0].mxu0
        %v1847 = vpop.f32.mrb[0].mxu0
        %1848 = vdwg.mxu0
        %1849 = vmatprep.subr.bf16.mxu0 0
        %1850 = vmatpush1.bf16.msra.mxu0 %v1695
        %1851 = vmatprep.subr.bf16.mxu0 0
        %1852 = vmatpush1.bf16.msra.mxu0 %v1698
        %1853 = vmatprep.subr.bf16.mxu0 0
        %1854 = vmatpush1.bf16.msra.mxu0 0
        %1855 = vmatprep.subr.bf16.mxu0 0
        %1856 = vmatpush1.bf16.msra.mxu0 0
        %1857 = vmatprep.subr.bf16.mxu0 0
        %1858 = vmatpush1.bf16.msra.mxu0 0
        %1859 = vmatprep.subr.bf16.mxu0 0
        %1860 = vmatpush1.bf16.msra.mxu0 0
        %1861 = vmatprep.subr.bf16.mxu0 0
        %1862 = vmatpush1.bf16.msra.mxu0 0
        %1863 = vmatprep.subr.bf16.mxu0 0
        %1864 = vmatpush1.bf16.msra.mxu0 0
        %1865 = vmatprep.subr.bf16.mxu0 0
        %1866 = vmatpush1.bf16.msra.mxu0 0
        %1867 = vmatprep.subr.bf16.mxu0 0
        %1868 = vmatpush1.bf16.msra.mxu0 0
        %1869 = vmatprep.subr.bf16.mxu0 0
        %1870 = vmatpush1.bf16.msra.mxu0 0
        %1871 = vmatprep.subr.bf16.mxu0 0
        %1872 = vmatpush1.bf16.msra.mxu0 0
        %1873 = vmatprep.subr.bf16.mxu0 0
        %1874 = vmatpush1.bf16.msra.mxu0 0
        %1875 = vmatprep.subr.bf16.mxu0 0
        %1876 = vmatpush1.bf16.msra.mxu0 0
        %1877 = vmatprep.subr.bf16.mxu0 0
        %1878 = vmatpush1.bf16.msra.mxu0 0
        %1879 = vmatprep.subr.bf16.mxu0 0
        %1880 = vmatpush1.bf16.msra.mxu0 0
        %1881 = vmatprep.mubr.bf16.mxu0 0
        %1882 = vmatmul.mubr.bf16.gmra.mrb[0].mxu0 %v1725
        %v1883 = vpop.f32.mrb[0].mxu0
        %v1884 = vadd.f32 %v1844, %v1883
        %v1885 = vpop.f32.mrb[0].mxu0
        %v1886 = vpop.f32.mrb[0].mxu0
        %v1887 = vpop.f32.mrb[0].mxu0
        %1888 = vdwg.mxu0
        %vm1889 = vcmp.ge.f32.partialorder %v1803, 0.0
        %vm1890 = vcmp.ge.f32.partialorder %v1805, 0.0
        %vm1891 = vcmp.ge.f32.partialorder %v1884, 0.0
        %v1892 = vstv %s1139
        %v1893 = vmul.f32 %v1892, %v1803
        %v1894 = vmul.f32 %v1892, %v1805
        %v1895 = vmul.f32 %v1892, %v1884
        %v1896 = vsel %vm1889, %v1803, %v1893
        %v1897 = vsel %vm1890, %v1805, %v1894
        %v1898 = vsel %vm1891, %v1884, %v1895
        %v1899 = vmul.f32 %v1896, %v668
        %v1900 = vmul.f32 %v1897, %v672
        %v1901 = vmul.f32 %v1898, %v676
        %v1904 = vcombine.low %v1899, %v1900
        %1906 = vst [vmem:[%s292] sm:$0xff] %v1904
        %1907 = vst [vmem:[%s292 + $0x8] sm:$0xf] %v1901
        %p1908 = scmp.lt.s32.totalorder %s19, 1
        %s1909 = scalar_select %p1908, %s19, 1
        %s1910 = smul.addr %s1909, 3
        %s1911 = smul.addr %s1910, 4
        %s1912 = scalar_lea.vmem %s7, %s1911
        // Predicated region
        $region53: #{conv_cam_layer_forward.1} parent=47 // pred_check
          %p1913 = pneg %p189
        $region54: #{conv_cam_layer_forward.1} parent=47 // pred_check_branch
          %1915 = sbr.rel (%p1913) target = $region56
        $region55: #{conv_cam_layer_forward.1} parent=47 // pred_region
          _
        $region56: #{conv_cam_layer_forward.1} parent=47 // pred_fallthru
          _
      $region48: #{conv_cam_layer_forward.1} parent=5 // pred_fallthru
        _
      %p1916 = scmp.le.s32.totalorder 2, %s14
      // Predicated region
      $region57: #{conv_cam_layer_forward.1} parent=5 // pred_check
        %p1917 = pneg %p1916
      $region58: #{conv_cam_layer_forward.1} parent=5 // pred_check_branch
        %1919 = sbr.rel (%p1917) target = $region60
      $region59: #{conv_cam_layer_forward.1} parent=5 // pred_region
        %s1920 = ssub.s32 %s14, 2
        // Predicated region
        $region61: #{conv_cam_layer_forward.1} parent=59 // pred_check
          %p1921 = pneg %p195
        $region62: #{conv_cam_layer_forward.1} parent=59 // pred_check_branch
          %1923 = sbr.rel (%p1921) target = $region64
        $region63: #{conv_cam_layer_forward.1} parent=59 // pred_region
          %p1924 = scmp.lt.s32.totalorder %s20, 1
          %s1925 = scalar_select %p1924, %s20, 1
          %s1926 = smul.addr %s1925, 3
          %s1927 = smul.addr %s1926, 4
          %s1928 = scalar_lea.vmem %s7, %s1927
        $region64: #{conv_cam_layer_forward.1} parent=59 // pred_fallthru
          _
      $region60: #{conv_cam_layer_forward.1} parent=5 // pred_fallthru
        _
    $region6: #{conv_cam_layer_forward.1} parent=1 // loop_footer
      %s18 = sadd.s32 1, %s14
    $region7: #{conv_cam_layer_forward.1} parent=1 // loop_footer_branch
      %13 = sbr.rel target = $region3
    $region8: #{conv_cam_layer_forward.1} parent=1 // loop_exit
      _
    %1929 = vsyncpa [#allocation5], 1
    %s1930 = scalar_lea.sflag [#allocation5], 1
    %1931 = vsyncpa %s1930, 1

</llo_original>
